<compile_context>
chip_gen: v6e
topology: v6e:2x2x1
jax: 0.10.0
libtpu: 0.0.40
codegen_flags: <defaults>
</compile_context>

<pallas_src>
import functools
import math

import jax
import jax.numpy as jnp
from jax import lax
from jax.experimental import pallas as pl
from jax.experimental.pallas import tpu as pltpu

BN_EPS = 1e-5


# --------------------------- wrapper-side (hoisted) prep ---------------------------
def build_operator_stack(adj):
    """Stack the three branch operators [adj, I-P, P-P@P] -> (3N, N), f32.

    Precondition (same as the torch module): relu(sym(adj)) is not identically zero,
    otherwise ||A||_F^2 == 0 and P is inf/NaN.
    """
    n = adj.shape[0]
    a_sym = jnp.maximum(jnp.maximum(adj, adj.T), 0.0)
    eye = jnp.eye(n, dtype=jnp.float32)
    fro2 = jnp.sum(a_sym * a_sym)
    p = 0.5 * (eye + a_sym / fro2)
    h1 = eye - p
    h2 = p - jnp.dot(p, p, preferred_element_type=jnp.float32)
    # NOTE: branch 1 uses the *original* (un-symmetrized) adj, exactly like the torch code.
    return jnp.concatenate([adj, h1, h2], axis=0)


def _vmem_limit_bytes():
    """Device-aware VMEM limit: ~3/4 of physical (v7x: 64 MiB -> 48 MiB, v6e/v5e: 128 -> 96)."""
    try:
        cap = int(pltpu.get_tpu_info().vmem_capacity_bytes)
    except Exception:
        cap = 64 * 1024 * 1024  # conservative fallback (safe on every current chip)
    return max(32 * 1024 * 1024, min(cap * 3 // 4, 112 * 1024 * 1024))


def _max_lanes_for_vmem(n, f, vmem_limit):
    """Largest lane width (F*bb) such that the per-step working set fits ~half the VMEM limit.

    Per lane (f32 bytes):
      x block + out block, double-buffered:   2 * 2 * N * 4
      y = BN/PReLU(M @ x) intermediate:       3 * N * 4
      attention intermediates (~14 (N, bb)):  14 * N * 4 / F
    """
    per_lane = 4 * (4 * n + 3 * n + (14 * n + f - 1) // f)
    cap = max(128, (vmem_limit // 2) // per_lane)
    return (cap // 128) * 128


def _pick_batch_tile(batch, in_feat, max_lanes):
    """Pick the batch tile bb:
      - bb divides batch and F*bb stays under the VMEM-derived lane cap
      - prefer bb % 128 == 0 (whole-vreg per-feature chunks, unmasked ops/stores)
      - prefer >= 2 grid steps (megacore sharding on v7x + DMA/compute overlap)
    """
    bb_cap = max(1, max_lanes // in_feat)
    divs = [d for d in range(1, batch + 1) if batch % d == 0 and d <= bb_cap]
    for need_mult128, need_multi_step in ((True, True), (True, False),
                                          (False, True), (False, False)):
        cand = [d for d in divs
                if (not need_mult128 or d % 128 == 0)
                and (not need_multi_step or batch // d >= 2)]
        if cand:
            return max(cand)
    return batch


# --------------------------------- the kernel --------------------------------------
def gnn_block_kernel(m_ref, xt_ref, scale_ref, shift_ref, wvec_ref, alphas_ref, o_ref):
    n_nodes = m_ref.shape[1]                 # N (graph nodes / feat_dim)
    in_feat = scale_ref.shape[1]             # F (node features / in_feat)
    lanes = xt_ref.shape[2]                  # F * bb
    bb = lanes // in_feat

    xt = xt_ref[0]                           # (N, F*bb) f32, feature-major lane slab

    # --- three scattering branches as ONE fused GEMM (bf16 operands, f32 accumulation) ---
    y = jnp.dot(m_ref[...], xt.astype(jnp.bfloat16),
                preferred_element_type=jnp.float32)                     # (3N, F*bb)

    a_sc = alphas_ref[0]                     # ScatteringLayer PReLU alpha
    a_att = alphas_ref[1]                    # SpectralAttention PReLU alpha

    # --- per-feature chunks: folded eval BN + PReLU squash, and attention-logit reduction ---
    # chunk f is the lane range [f*bb, (f+1)*bb): whole vregs when bb % 128 == 0.
    # TODO(synk): nn.Dropout is stochastic only in training; eval-mode identity here.
    x_chunks = []
    y_chunks = []
    base = None                              # (N, bb): <x[n,:,b], w_att[:F]>
    lsum = [None, None, None]                # (N, bb) per branch: <scat_s[n,:,b], w_att[F:]>
    for f in range(in_feat):
        lo, hi = f * bb, (f + 1) * bb
        xf = xt[:, lo:hi]                                             # (N, bb)
        yf = y[:, lo:hi]                                              # (3N, bb)
        yf = yf * scale_ref[:, f:f + 1] + shift_ref[:, f:f + 1]       # folded eval BN
        yf = jnp.where(yf >= 0.0, yf, a_sc * yf)                      # PReLU squash

        wa = wvec_ref[f]                      # scalar (SMEM)
        wb = wvec_ref[in_feat + f]            # scalar (SMEM)
        t = wa * xf
        base = t if base is None else base + t
        for s in range(3):
            c = wb * yf[s * n_nodes:(s + 1) * n_nodes]
            lsum[s] = c if lsum[s] is None else lsum[s] + c

        x_chunks.append(xf)
        y_chunks.append(yf)

    # --- spectral attention: PReLU logits, softmax over the 3 branches (EUP exp/recip) ---
    def prelu_att(v):
        return jnp.where(v >= 0.0, v, a_att * v)

    l0 = prelu_att(lsum[0] + base)
    l1 = prelu_att(lsum[1] + base)
    l2 = prelu_att(lsum[2] + base)
    mx = jnp.maximum(jnp.maximum(l0, l1), l2)
    e0 = jnp.exp(l0 - mx)
    e1 = jnp.exp(l1 - mx)
    e2 = jnp.exp(l2 - mx)
    # softmax denominator on the EUP; fold the 1/3 branch-mean into the same reciprocal
    inv3 = pl.reciprocal(e0 + e1 + e2, approx=True) * (1.0 / 3.0)     # (N, bb)
    w0 = e0 * inv3
    w1 = e1 * inv3
    w2 = e2 * inv3

    # --- attention-weighted mean over branches + residual (pure elementwise, no broadcast GEMM) ---
    for f in range(in_feat):
        lo, hi = f * bb, (f + 1) * bb
        yf = y_chunks[f]
        mixf = (w0 * yf[0:n_nodes]
                + w1 * yf[n_nodes:2 * n_nodes]
                + w2 * yf[2 * n_nodes:3 * n_nodes])
        o_ref[0, :, lo:hi] = mixf + x_chunks[f]


# --------------------------------- the wrapper --------------------------------------
@functools.partial(jax.jit, static_argnames=("bb", "vmem_limit"))
def _gnn_block_impl(x, adj, w_att, bn_gamma, bn_beta, bn_mean, bn_var, alphas,
                    *, bb, vmem_limit):
    B, N, F = x.shape
    G = B // bb
    L = F * bb

    # ---- prep hoisted off the kernel critical path ----
    m_stack = build_operator_stack(adj).astype(jnp.bfloat16)            # (3N, N) MXU operand

    inv_std = lax.rsqrt(bn_var + BN_EPS)
    scale = (bn_gamma * inv_std).reshape(3 * N, F).astype(jnp.float32)  # folded eval BN (tiny)
    shift = (bn_beta - bn_mean * bn_gamma * inv_std).reshape(3 * N, F).astype(jnp.float32)

    # Batch-tiled, feature-major lane slab: xt[i, n, f*bb + b'] = x[i*bb + b', n, f].
    # (For stacked GNNblock layers, do this conversion once outside the stack and keep the
    #  slab layout between layers — it is a full HBM round trip here.)
    xt = jnp.transpose(x.reshape(G, bb, N, F), (0, 2, 3, 1)).reshape(G, N, L)
    # TODO(synk): on v5e (HBM-bound) x/out could be streamed as bf16 to halve traffic.

    wvec = w_att.astype(jnp.float32)                                    # (2F,) SMEM scalars
    alphas = alphas.astype(jnp.float32)                                 # (2,)  SMEM scalars

    resident = lambda i: (0, 0)   # constant block index -> stays VMEM-resident across the grid
    out_blocked = pl.pallas_call(
        gnn_block_kernel,
        out_shape=jax.ShapeDtypeStruct((G, N, L), jnp.float32),
        grid=(G,),
        in_specs=[
            pl.BlockSpec((3 * N, N), resident),                 # stacked [adj; I-P; P-P^2], bf16
            pl.BlockSpec((1, N, L), lambda i: (i, 0, 0)),       # x slab, tiled over batch
            pl.BlockSpec((3 * N, F), resident),                 # folded BN scale (tiny, f32)
            pl.BlockSpec((3 * N, F), resident),                 # folded BN shift (tiny, f32)
            pl.BlockSpec(memory_space=pltpu.MemorySpace.SMEM),  # attention weight vector (2F,)
            pl.BlockSpec(memory_space=pltpu.MemorySpace.SMEM),  # PReLU alphas (2,)
        ],
        out_specs=pl.BlockSpec((1, N, L), lambda i: (i, 0, 0)),
        compiler_params=pltpu.CompilerParams(
            dimension_semantics=("parallel",),                  # megacore sharding on v7x
            vmem_limit_bytes=vmem_limit),
    )(m_stack, xt, scale, shift, wvec, alphas)

    # back to (B, N, F)
    out = jnp.transpose(out_blocked.reshape(G, N, F, bb), (0, 3, 1, 2)).reshape(B, N, F)
    return out


def gnn_block(x, adj, w_att, bn_gamma, bn_beta, bn_mean, bn_var, alphas, block_batch=None):
    B, N, F = x.shape
    vmem_limit = _vmem_limit_bytes()
    max_lanes = _max_lanes_for_vmem(N, F, vmem_limit)
    bb = int(block_batch) if block_batch is not None else _pick_batch_tile(B, F, max_lanes)
    assert B % bb == 0, "batch must be divisible by the batch tile"
    return _gnn_block_impl(x, adj, w_att, bn_gamma, bn_beta, bn_mean, bn_var, alphas,
                           bb=bb, vmem_limit=vmem_limit)


# ----------------------- pure-JAX reference (mirrors torch) -----------------------
def gnn_block_ref(x, adj, w_att, bn_gamma, bn_beta, bn_mean, bn_var, alphas,
                  matmul_dtype=jnp.float32):
    # matmul_dtype=bf16 mirrors the kernel's MXU operand precision (f32 accumulation);
    # everything else is f32 and torch-faithful.
    B, N, F = x.shape
    ops = build_operator_stack(adj).reshape(3, N, N).astype(matmul_dtype)
    xm = x.astype(matmul_dtype)
    gamma = bn_gamma.reshape(3, N * F)
    beta = bn_beta.reshape(3, N * F)
    mean = bn_mean.reshape(3, N * F)
    var = bn_var.reshape(3, N * F)

    def branch(idx):
        y = jnp.einsum("nm,bmf->bnf", ops[idx], xm,
                       preferred_element_type=jnp.float32)
        yf = y.reshape(B, N * F)
        yf = (yf - mean[idx]) / jnp.sqrt(var[idx] + BN_EPS) * gamma[idx] + beta[idx]
        return yf.reshape(B, N, F)

    a_sc, a_att = alphas[0], alphas[1]
    scat = jnp.stack([branch(0), branch(1), branch(2)], axis=1)            # (B, 3, N, F)
    scat = jnp.where(scat >= 0, scat, a_sc * scat)                         # squash; dropout = id

    cat = jnp.concatenate(
        [jnp.broadcast_to(x[:, None], (B, 3, N, F)), scat], axis=3)        # (B, 3, N, 2F)
    logits = cat @ w_att                                                   # (B, 3, N)
    logits = jnp.where(logits >= 0, logits, a_att * logits)
    att = jax.nn.softmax(logits, axis=1)
    return jnp.mean(att[..., None] * scat, axis=1) + x


if __name__ == "__main__":
    # batch, feat_dim (graph nodes N), in_feat (node features F); total x is only 128 KiB.
    # B=256 lets the auto-tiler pick bb=128 (1024-lane blocks) with a 2-step grid.
    B, N, F = 256, 16, 8

    key = jax.random.PRNGKey(0)
    kx, ka, kw, kg, kb, km, kv = jax.random.split(key, 7)

    x = jax.random.normal(kx, (B, N, F), dtype=jnp.float32)

    # ScatteringLayer.adj ~ U(-1/sqrt(feat_dim), 1/sqrt(feat_dim))
    stdv = 1.0 / math.sqrt(N)
    adj = jax.random.uniform(ka, (N, N), jnp.float32, -stdv, stdv)

    # SpectralAttention.weight_attention ~ U(-1/sqrt(2*in_feat), 1/sqrt(2*in_feat))
    stdv2 = 1.0 / math.sqrt(2 * F)
    w_att = jax.random.uniform(kw, (2 * F,), jnp.float32, -stdv2, stdv2)

    # eval-mode BatchNorm1d stats, one set per branch (randomized so the folded affine is exercised)
    bn_gamma = jax.random.uniform(kg, (3, N, F), jnp.float32, 0.5, 1.5)
    bn_beta = 0.1 * jax.random.normal(kb, (3, N, F), jnp.float32)
    bn_mean = 0.1 * jax.random.normal(km, (3, N, F), jnp.float32)
    bn_var = jax.random.uniform(kv, (3, N, F), jnp.float32, 0.5, 1.5)

    # PReLU alphas: [ScatteringLayer.activation, SpectralAttention.prelu], default 0.25
    alphas = jnp.array([0.25, 0.25], dtype=jnp.float32)

    out = gnn_block(x, adj, w_att, bn_gamma, bn_beta, bn_mean, bn_var, alphas)
    out = jax.block_until_ready(out)

    # Reference with bf16-cast matmul operands to match the kernel's MXU inputs; remaining
    # differences (approx reciprocal in softmax, BN affine folding) are ~1e-3 level.
    ref = gnn_block_ref(x, adj, w_att, bn_gamma, bn_beta, bn_mean, bn_var, alphas,
                        matmul_dtype=jnp.bfloat16)

    err = float(jnp.max(jnp.abs(out - ref)))
    assert jnp.allclose(out, ref, atol=1e-2, rtol=1e-2), f"max abs err {err}"
    print("KERNEL_OK")
</pallas_src>

<mosaic_0001>
module attributes {stable_mosaic.version = 11 : i64} {
  func.func @gnn_block_kernel(%arg0: i32, %arg1: memref<48x16xbf16, #tpu.memory_space<vmem>>, %arg2: memref<1x16x1024xf32, #tpu.memory_space<vmem>>, %arg3: memref<48x8xf32, #tpu.memory_space<vmem>>, %arg4: memref<48x8xf32, #tpu.memory_space<vmem>>, %arg5: memref<16xf32, #tpu.memory_space<smem>>, %arg6: memref<2xf32, #tpu.memory_space<smem>>, %arg7: memref<1x16x1024xf32, #tpu.memory_space<vmem>>) attributes {dimension_semantics = [#tpu.dimension_semantics<parallel>], iteration_bounds = array<i64: 2>, scalar_prefetch = 0 : i64, scratch_operands = 0 : i64, tpu.core_type = #tpu.core_type<tc>, window_params = [{pipeline_mode = #tpu.pipeline_mode<synchronous>, transform_indices = @transform_0, window_bounds = array<i64: 48, 16>}, {transform_indices = @transform_1, window_bounds = array<i64: 1, 16, 1024>}, {pipeline_mode = #tpu.pipeline_mode<synchronous>, transform_indices = @transform_2, window_bounds = array<i64: 48, 8>}, {pipeline_mode = #tpu.pipeline_mode<synchronous>, transform_indices = @transform_3, window_bounds = array<i64: 48, 8>}, {transform_indices = @transform_4, window_bounds = array<i64: 16>}, {transform_indices = @transform_5, window_bounds = array<i64: 2>}, {transform_indices = @transform_6, window_bounds = array<i64: 1, 16, 1024>}]} {
    %c0 = arith.constant 0 : index
    %c0_0 = arith.constant 0 : index
    %c0_1 = arith.constant 0 : index
    %0 = vector.load %arg2[%c0, %c0_0, %c0_1] : memref<1x16x1024xf32, #tpu.memory_space<vmem>>, vector<1x16x1024xf32>
    %1 = vector.shape_cast %0 : vector<1x16x1024xf32> to vector<16x1024xf32>
    %c0_2 = arith.constant 0 : index
    %c0_3 = arith.constant 0 : index
    %2 = vector.load %arg1[%c0_2, %c0_3] : memref<48x16xbf16, #tpu.memory_space<vmem>>, vector<48x16xbf16>
    %3 = arith.truncf %1 : vector<16x1024xf32> to vector<16x1024xbf16>
    %cst = arith.constant dense<0.000000e+00> : vector<48x1024xf32>
    %4 = tpu.matmul %2, %3, %cst {dimension_numbers = #tpu.dot_dimension_numbers<[1], [0], [0], [1], [0, 0, 1, 1], [], []>} : vector<48x16xbf16>, vector<16x1024xbf16>, vector<48x1024xf32> -> vector<48x1024xf32>
    %c0_4 = arith.constant 0 : index
    %5 = memref.load %arg6[%c0_4] : memref<2xf32, #tpu.memory_space<smem>>
    %c1 = arith.constant 1 : index
    %6 = memref.load %arg6[%c1] : memref<2xf32, #tpu.memory_space<smem>>
    %7 = vector.extract_strided_slice %1 {offsets = [0, 0], sizes = [16, 128], strides = [1, 1]} : vector<16x1024xf32> to vector<16x128xf32>
    %8 = vector.extract_strided_slice %4 {offsets = [0, 0], sizes = [48, 128], strides = [1, 1]} : vector<48x1024xf32> to vector<48x128xf32>
    %c0_5 = arith.constant 0 : index
    %c0_6 = arith.constant 0 : index
    %9 = vector.load %arg3[%c0_5, %c0_6] : memref<48x8xf32, #tpu.memory_space<vmem>>, vector<48x1xf32>
    %10 = vector.broadcast %9 : vector<48x1xf32> to vector<48x128xf32>
    %11 = arith.mulf %8, %10 : vector<48x128xf32>
    %c0_7 = arith.constant 0 : index
    %c0_8 = arith.constant 0 : index
    %12 = vector.load %arg4[%c0_7, %c0_8] : memref<48x8xf32, #tpu.memory_space<vmem>>, vector<48x1xf32>
    %13 = vector.broadcast %12 : vector<48x1xf32> to vector<48x128xf32>
    %14 = arith.addf %11, %13 : vector<48x128xf32>
    %cst_9 = arith.constant 0.000000e+00 : f32
    %15 = vector.broadcast %cst_9 : f32 to vector<48x128xf32>
    %16 = arith.cmpf oge, %14, %15 : vector<48x128xf32>
    %17 = vector.broadcast %5 : f32 to vector<48x128xf32>
    %18 = arith.mulf %17, %14 : vector<48x128xf32>
    %19 = arith.select %16, %14, %18 : vector<48x128xi1>, vector<48x128xf32>
    %c0_10 = arith.constant 0 : index
    %20 = memref.load %arg5[%c0_10] : memref<16xf32, #tpu.memory_space<smem>>
    %c8 = arith.constant 8 : index
    %21 = memref.load %arg5[%c8] : memref<16xf32, #tpu.memory_space<smem>>
    %22 = vector.broadcast %20 : f32 to vector<16x128xf32>
    %23 = arith.mulf %22, %7 : vector<16x128xf32>
    %24 = vector.extract_strided_slice %19 {offsets = [0, 0], sizes = [16, 128], strides = [1, 1]} : vector<48x128xf32> to vector<16x128xf32>
    %25 = vector.broadcast %21 : f32 to vector<16x128xf32>
    %26 = arith.mulf %25, %24 : vector<16x128xf32>
    %27 = vector.extract_strided_slice %19 {offsets = [16, 0], sizes = [16, 128], strides = [1, 1]} : vector<48x128xf32> to vector<16x128xf32>
    %28 = vector.broadcast %21 : f32 to vector<16x128xf32>
    %29 = arith.mulf %28, %27 : vector<16x128xf32>
    %30 = vector.extract_strided_slice %19 {offsets = [32, 0], sizes = [16, 128], strides = [1, 1]} : vector<48x128xf32> to vector<16x128xf32>
    %31 = vector.broadcast %21 : f32 to vector<16x128xf32>
    %32 = arith.mulf %31, %30 : vector<16x128xf32>
    %33 = vector.extract_strided_slice %1 {offsets = [0, 128], sizes = [16, 128], strides = [1, 1]} : vector<16x1024xf32> to vector<16x128xf32>
    %34 = vector.extract_strided_slice %4 {offsets = [0, 128], sizes = [48, 128], strides = [1, 1]} : vector<48x1024xf32> to vector<48x128xf32>
    %c0_11 = arith.constant 0 : index
    %c1_12 = arith.constant 1 : index
    %35 = vector.load %arg3[%c0_11, %c1_12] : memref<48x8xf32, #tpu.memory_space<vmem>>, vector<48x1xf32>
    %36 = vector.broadcast %35 : vector<48x1xf32> to vector<48x128xf32>
    %37 = arith.mulf %34, %36 : vector<48x128xf32>
    %c0_13 = arith.constant 0 : index
    %c1_14 = arith.constant 1 : index
    %38 = vector.load %arg4[%c0_13, %c1_14] : memref<48x8xf32, #tpu.memory_space<vmem>>, vector<48x1xf32>
    %39 = vector.broadcast %38 : vector<48x1xf32> to vector<48x128xf32>
    %40 = arith.addf %37, %39 : vector<48x128xf32>
    %cst_15 = arith.constant 0.000000e+00 : f32
    %41 = vector.broadcast %cst_15 : f32 to vector<48x128xf32>
    %42 = arith.cmpf oge, %40, %41 : vector<48x128xf32>
    %43 = vector.broadcast %5 : f32 to vector<48x128xf32>
    %44 = arith.mulf %43, %40 : vector<48x128xf32>
    %45 = arith.select %42, %40, %44 : vector<48x128xi1>, vector<48x128xf32>
    %c1_16 = arith.constant 1 : index
    %46 = memref.load %arg5[%c1_16] : memref<16xf32, #tpu.memory_space<smem>>
    %c9 = arith.constant 9 : index
    %47 = memref.load %arg5[%c9] : memref<16xf32, #tpu.memory_space<smem>>
    %48 = vector.broadcast %46 : f32 to vector<16x128xf32>
    %49 = arith.mulf %48, %33 : vector<16x128xf32>
    %50 = arith.addf %23, %49 : vector<16x128xf32>
    %51 = vector.extract_strided_slice %45 {offsets = [0, 0], sizes = [16, 128], strides = [1, 1]} : vector<48x128xf32> to vector<16x128xf32>
    %52 = vector.broadcast %47 : f32 to vector<16x128xf32>
    %53 = arith.mulf %52, %51 : vector<16x128xf32>
    %54 = arith.addf %26, %53 : vector<16x128xf32>
    %55 = vector.extract_strided_slice %45 {offsets = [16, 0], sizes = [16, 128], strides = [1, 1]} : vector<48x128xf32> to vector<16x128xf32>
    %56 = vector.broadcast %47 : f32 to vector<16x128xf32>
    %57 = arith.mulf %56, %55 : vector<16x128xf32>
    %58 = arith.addf %29, %57 : vector<16x128xf32>
    %59 = vector.extract_strided_slice %45 {offsets = [32, 0], sizes = [16, 128], strides = [1, 1]} : vector<48x128xf32> to vector<16x128xf32>
    %60 = vector.broadcast %47 : f32 to vector<16x128xf32>
    %61 = arith.mulf %60, %59 : vector<16x128xf32>
    %62 = arith.addf %32, %61 : vector<16x128xf32>
    %63 = vector.extract_strided_slice %1 {offsets = [0, 256], sizes = [16, 128], strides = [1, 1]} : vector<16x1024xf32> to vector<16x128xf32>
    %64 = vector.extract_strided_slice %4 {offsets = [0, 256], sizes = [48, 128], strides = [1, 1]} : vector<48x1024xf32> to vector<48x128xf32>
    %c0_17 = arith.constant 0 : index
    %c2 = arith.constant 2 : index
    %65 = vector.load %arg3[%c0_17, %c2] : memref<48x8xf32, #tpu.memory_space<vmem>>, vector<48x1xf32>
    %66 = vector.broadcast %65 : vector<48x1xf32> to vector<48x128xf32>
    %67 = arith.mulf %64, %66 : vector<48x128xf32>
    %c0_18 = arith.constant 0 : index
    %c2_19 = arith.constant 2 : index
    %68 = vector.load %arg4[%c0_18, %c2_19] : memref<48x8xf32, #tpu.memory_space<vmem>>, vector<48x1xf32>
    %69 = vector.broadcast %68 : vector<48x1xf32> to vector<48x128xf32>
    %70 = arith.addf %67, %69 : vector<48x128xf32>
    %cst_20 = arith.constant 0.000000e+00 : f32
    %71 = vector.broadcast %cst_20 : f32 to vector<48x128xf32>
    %72 = arith.cmpf oge, %70, %71 : vector<48x128xf32>
    %73 = vector.broadcast %5 : f32 to vector<48x128xf32>
    %74 = arith.mulf %73, %70 : vector<48x128xf32>
    %75 = arith.select %72, %70, %74 : vector<48x128xi1>, vector<48x128xf32>
    %c2_21 = arith.constant 2 : index
    %76 = memref.load %arg5[%c2_21] : memref<16xf32, #tpu.memory_space<smem>>
    %c10 = arith.constant 10 : index
    %77 = memref.load %arg5[%c10] : memref<16xf32, #tpu.memory_space<smem>>
    %78 = vector.broadcast %76 : f32 to vector<16x128xf32>
    %79 = arith.mulf %78, %63 : vector<16x128xf32>
    %80 = arith.addf %50, %79 : vector<16x128xf32>
    %81 = vector.extract_strided_slice %75 {offsets = [0, 0], sizes = [16, 128], strides = [1, 1]} : vector<48x128xf32> to vector<16x128xf32>
    %82 = vector.broadcast %77 : f32 to vector<16x128xf32>
    %83 = arith.mulf %82, %81 : vector<16x128xf32>
    %84 = arith.addf %54, %83 : vector<16x128xf32>
    %85 = vector.extract_strided_slice %75 {offsets = [16, 0], sizes = [16, 128], strides = [1, 1]} : vector<48x128xf32> to vector<16x128xf32>
    %86 = vector.broadcast %77 : f32 to vector<16x128xf32>
    %87 = arith.mulf %86, %85 : vector<16x128xf32>
    %88 = arith.addf %58, %87 : vector<16x128xf32>
    %89 = vector.extract_strided_slice %75 {offsets = [32, 0], sizes = [16, 128], strides = [1, 1]} : vector<48x128xf32> to vector<16x128xf32>
    %90 = vector.broadcast %77 : f32 to vector<16x128xf32>
    %91 = arith.mulf %90, %89 : vector<16x128xf32>
    %92 = arith.addf %62, %91 : vector<16x128xf32>
    %93 = vector.extract_strided_slice %1 {offsets = [0, 384], sizes = [16, 128], strides = [1, 1]} : vector<16x1024xf32> to vector<16x128xf32>
    %94 = vector.extract_strided_slice %4 {offsets = [0, 384], sizes = [48, 128], strides = [1, 1]} : vector<48x1024xf32> to vector<48x128xf32>
    %c0_22 = arith.constant 0 : index
    %c3 = arith.constant 3 : index
    %95 = vector.load %arg3[%c0_22, %c3] : memref<48x8xf32, #tpu.memory_space<vmem>>, vector<48x1xf32>
    %96 = vector.broadcast %95 : vector<48x1xf32> to vector<48x128xf32>
    %97 = arith.mulf %94, %96 : vector<48x128xf32>
    %c0_23 = arith.constant 0 : index
    %c3_24 = arith.constant 3 : index
    %98 = vector.load %arg4[%c0_23, %c3_24] : memref<48x8xf32, #tpu.memory_space<vmem>>, vector<48x1xf32>
    %99 = vector.broadcast %98 : vector<48x1xf32> to vector<48x128xf32>
    %100 = arith.addf %97, %99 : vector<48x128xf32>
    %cst_25 = arith.constant 0.000000e+00 : f32
    %101 = vector.broadcast %cst_25 : f32 to vector<48x128xf32>
    %102 = arith.cmpf oge, %100, %101 : vector<48x128xf32>
    %103 = vector.broadcast %5 : f32 to vector<48x128xf32>
    %104 = arith.mulf %103, %100 : vector<48x128xf32>
    %105 = arith.select %102, %100, %104 : vector<48x128xi1>, vector<48x128xf32>
    %c3_26 = arith.constant 3 : index
    %106 = memref.load %arg5[%c3_26] : memref<16xf32, #tpu.memory_space<smem>>
    %c11 = arith.constant 11 : index
    %107 = memref.load %arg5[%c11] : memref<16xf32, #tpu.memory_space<smem>>
    %108 = vector.broadcast %106 : f32 to vector<16x128xf32>
    %109 = arith.mulf %108, %93 : vector<16x128xf32>
    %110 = arith.addf %80, %109 : vector<16x128xf32>
    %111 = vector.extract_strided_slice %105 {offsets = [0, 0], sizes = [16, 128], strides = [1, 1]} : vector<48x128xf32> to vector<16x128xf32>
    %112 = vector.broadcast %107 : f32 to vector<16x128xf32>
    %113 = arith.mulf %112, %111 : vector<16x128xf32>
    %114 = arith.addf %84, %113 : vector<16x128xf32>
    %115 = vector.extract_strided_slice %105 {offsets = [16, 0], sizes = [16, 128], strides = [1, 1]} : vector<48x128xf32> to vector<16x128xf32>
    %116 = vector.broadcast %107 : f32 to vector<16x128xf32>
    %117 = arith.mulf %116, %115 : vector<16x128xf32>
    %118 = arith.addf %88, %117 : vector<16x128xf32>
    %119 = vector.extract_strided_slice %105 {offsets = [32, 0], sizes = [16, 128], strides = [1, 1]} : vector<48x128xf32> to vector<16x128xf32>
    %120 = vector.broadcast %107 : f32 to vector<16x128xf32>
    %121 = arith.mulf %120, %119 : vector<16x128xf32>
    %122 = arith.addf %92, %121 : vector<16x128xf32>
    %123 = vector.extract_strided_slice %1 {offsets = [0, 512], sizes = [16, 128], strides = [1, 1]} : vector<16x1024xf32> to vector<16x128xf32>
    %124 = vector.extract_strided_slice %4 {offsets = [0, 512], sizes = [48, 128], strides = [1, 1]} : vector<48x1024xf32> to vector<48x128xf32>
    %c0_27 = arith.constant 0 : index
    %c4 = arith.constant 4 : index
    %125 = vector.load %arg3[%c0_27, %c4] : memref<48x8xf32, #tpu.memory_space<vmem>>, vector<48x1xf32>
    %126 = vector.broadcast %125 : vector<48x1xf32> to vector<48x128xf32>
    %127 = arith.mulf %124, %126 : vector<48x128xf32>
    %c0_28 = arith.constant 0 : index
    %c4_29 = arith.constant 4 : index
    %128 = vector.load %arg4[%c0_28, %c4_29] : memref<48x8xf32, #tpu.memory_space<vmem>>, vector<48x1xf32>
    %129 = vector.broadcast %128 : vector<48x1xf32> to vector<48x128xf32>
    %130 = arith.addf %127, %129 : vector<48x128xf32>
    %cst_30 = arith.constant 0.000000e+00 : f32
    %131 = vector.broadcast %cst_30 : f32 to vector<48x128xf32>
    %132 = arith.cmpf oge, %130, %131 : vector<48x128xf32>
    %133 = vector.broadcast %5 : f32 to vector<48x128xf32>
    %134 = arith.mulf %133, %130 : vector<48x128xf32>
    %135 = arith.select %132, %130, %134 : vector<48x128xi1>, vector<48x128xf32>
    %c4_31 = arith.constant 4 : index
    %136 = memref.load %arg5[%c4_31] : memref<16xf32, #tpu.memory_space<smem>>
    %c12 = arith.constant 12 : index
    %137 = memref.load %arg5[%c12] : memref<16xf32, #tpu.memory_space<smem>>
    %138 = vector.broadcast %136 : f32 to vector<16x128xf32>
    %139 = arith.mulf %138, %123 : vector<16x128xf32>
    %140 = arith.addf %110, %139 : vector<16x128xf32>
    %141 = vector.extract_strided_slice %135 {offsets = [0, 0], sizes = [16, 128], strides = [1, 1]} : vector<48x128xf32> to vector<16x128xf32>
    %142 = vector.broadcast %137 : f32 to vector<16x128xf32>
    %143 = arith.mulf %142, %141 : vector<16x128xf32>
    %144 = arith.addf %114, %143 : vector<16x128xf32>
    %145 = vector.extract_strided_slice %135 {offsets = [16, 0], sizes = [16, 128], strides = [1, 1]} : vector<48x128xf32> to vector<16x128xf32>
    %146 = vector.broadcast %137 : f32 to vector<16x128xf32>
    %147 = arith.mulf %146, %145 : vector<16x128xf32>
    %148 = arith.addf %118, %147 : vector<16x128xf32>
    %149 = vector.extract_strided_slice %135 {offsets = [32, 0], sizes = [16, 128], strides = [1, 1]} : vector<48x128xf32> to vector<16x128xf32>
    %150 = vector.broadcast %137 : f32 to vector<16x128xf32>
    %151 = arith.mulf %150, %149 : vector<16x128xf32>
    %152 = arith.addf %122, %151 : vector<16x128xf32>
    %153 = vector.extract_strided_slice %1 {offsets = [0, 640], sizes = [16, 128], strides = [1, 1]} : vector<16x1024xf32> to vector<16x128xf32>
    %154 = vector.extract_strided_slice %4 {offsets = [0, 640], sizes = [48, 128], strides = [1, 1]} : vector<48x1024xf32> to vector<48x128xf32>
    %c0_32 = arith.constant 0 : index
    %c5 = arith.constant 5 : index
    %155 = vector.load %arg3[%c0_32, %c5] : memref<48x8xf32, #tpu.memory_space<vmem>>, vector<48x1xf32>
    %156 = vector.broadcast %155 : vector<48x1xf32> to vector<48x128xf32>
    %157 = arith.mulf %154, %156 : vector<48x128xf32>
    %c0_33 = arith.constant 0 : index
    %c5_34 = arith.constant 5 : index
    %158 = vector.load %arg4[%c0_33, %c5_34] : memref<48x8xf32, #tpu.memory_space<vmem>>, vector<48x1xf32>
    %159 = vector.broadcast %158 : vector<48x1xf32> to vector<48x128xf32>
    %160 = arith.addf %157, %159 : vector<48x128xf32>
    %cst_35 = arith.constant 0.000000e+00 : f32
    %161 = vector.broadcast %cst_35 : f32 to vector<48x128xf32>
    %162 = arith.cmpf oge, %160, %161 : vector<48x128xf32>
    %163 = vector.broadcast %5 : f32 to vector<48x128xf32>
    %164 = arith.mulf %163, %160 : vector<48x128xf32>
    %165 = arith.select %162, %160, %164 : vector<48x128xi1>, vector<48x128xf32>
    %c5_36 = arith.constant 5 : index
    %166 = memref.load %arg5[%c5_36] : memref<16xf32, #tpu.memory_space<smem>>
    %c13 = arith.constant 13 : index
    %167 = memref.load %arg5[%c13] : memref<16xf32, #tpu.memory_space<smem>>
    %168 = vector.broadcast %166 : f32 to vector<16x128xf32>
    %169 = arith.mulf %168, %153 : vector<16x128xf32>
    %170 = arith.addf %140, %169 : vector<16x128xf32>
    %171 = vector.extract_strided_slice %165 {offsets = [0, 0], sizes = [16, 128], strides = [1, 1]} : vector<48x128xf32> to vector<16x128xf32>
    %172 = vector.broadcast %167 : f32 to vector<16x128xf32>
    %173 = arith.mulf %172, %171 : vector<16x128xf32>
    %174 = arith.addf %144, %173 : vector<16x128xf32>
    %175 = vector.extract_strided_slice %165 {offsets = [16, 0], sizes = [16, 128], strides = [1, 1]} : vector<48x128xf32> to vector<16x128xf32>
    %176 = vector.broadcast %167 : f32 to vector<16x128xf32>
    %177 = arith.mulf %176, %175 : vector<16x128xf32>
    %178 = arith.addf %148, %177 : vector<16x128xf32>
    %179 = vector.extract_strided_slice %165 {offsets = [32, 0], sizes = [16, 128], strides = [1, 1]} : vector<48x128xf32> to vector<16x128xf32>
    %180 = vector.broadcast %167 : f32 to vector<16x128xf32>
    %181 = arith.mulf %180, %179 : vector<16x128xf32>
    %182 = arith.addf %152, %181 : vector<16x128xf32>
    %183 = vector.extract_strided_slice %1 {offsets = [0, 768], sizes = [16, 128], strides = [1, 1]} : vector<16x1024xf32> to vector<16x128xf32>
    %184 = vector.extract_strided_slice %4 {offsets = [0, 768], sizes = [48, 128], strides = [1, 1]} : vector<48x1024xf32> to vector<48x128xf32>
    %c0_37 = arith.constant 0 : index
    %c6 = arith.constant 6 : index
    %185 = vector.load %arg3[%c0_37, %c6] : memref<48x8xf32, #tpu.memory_space<vmem>>, vector<48x1xf32>
    %186 = vector.broadcast %185 : vector<48x1xf32> to vector<48x128xf32>
    %187 = arith.mulf %184, %186 : vector<48x128xf32>
    %c0_38 = arith.constant 0 : index
    %c6_39 = arith.constant 6 : index
    %188 = vector.load %arg4[%c0_38, %c6_39] : memref<48x8xf32, #tpu.memory_space<vmem>>, vector<48x1xf32>
    %189 = vector.broadcast %188 : vector<48x1xf32> to vector<48x128xf32>
    %190 = arith.addf %187, %189 : vector<48x128xf32>
    %cst_40 = arith.constant 0.000000e+00 : f32
    %191 = vector.broadcast %cst_40 : f32 to vector<48x128xf32>
    %192 = arith.cmpf oge, %190, %191 : vector<48x128xf32>
    %193 = vector.broadcast %5 : f32 to vector<48x128xf32>
    %194 = arith.mulf %193, %190 : vector<48x128xf32>
    %195 = arith.select %192, %190, %194 : vector<48x128xi1>, vector<48x128xf32>
    %c6_41 = arith.constant 6 : index
    %196 = memref.load %arg5[%c6_41] : memref<16xf32, #tpu.memory_space<smem>>
    %c14 = arith.constant 14 : index
    %197 = memref.load %arg5[%c14] : memref<16xf32, #tpu.memory_space<smem>>
    %198 = vector.broadcast %196 : f32 to vector<16x128xf32>
    %199 = arith.mulf %198, %183 : vector<16x128xf32>
    %200 = arith.addf %170, %199 : vector<16x128xf32>
    %201 = vector.extract_strided_slice %195 {offsets = [0, 0], sizes = [16, 128], strides = [1, 1]} : vector<48x128xf32> to vector<16x128xf32>
    %202 = vector.broadcast %197 : f32 to vector<16x128xf32>
    %203 = arith.mulf %202, %201 : vector<16x128xf32>
    %204 = arith.addf %174, %203 : vector<16x128xf32>
    %205 = vector.extract_strided_slice %195 {offsets = [16, 0], sizes = [16, 128], strides = [1, 1]} : vector<48x128xf32> to vector<16x128xf32>
    %206 = vector.broadcast %197 : f32 to vector<16x128xf32>
    %207 = arith.mulf %206, %205 : vector<16x128xf32>
    %208 = arith.addf %178, %207 : vector<16x128xf32>
    %209 = vector.extract_strided_slice %195 {offsets = [32, 0], sizes = [16, 128], strides = [1, 1]} : vector<48x128xf32> to vector<16x128xf32>
    %210 = vector.broadcast %197 : f32 to vector<16x128xf32>
    %211 = arith.mulf %210, %209 : vector<16x128xf32>
    %212 = arith.addf %182, %211 : vector<16x128xf32>
    %213 = vector.extract_strided_slice %1 {offsets = [0, 896], sizes = [16, 128], strides = [1, 1]} : vector<16x1024xf32> to vector<16x128xf32>
    %214 = vector.extract_strided_slice %4 {offsets = [0, 896], sizes = [48, 128], strides = [1, 1]} : vector<48x1024xf32> to vector<48x128xf32>
    %c0_42 = arith.constant 0 : index
    %c7 = arith.constant 7 : index
    %215 = vector.load %arg3[%c0_42, %c7] : memref<48x8xf32, #tpu.memory_space<vmem>>, vector<48x1xf32>
    %216 = vector.broadcast %215 : vector<48x1xf32> to vector<48x128xf32>
    %217 = arith.mulf %214, %216 : vector<48x128xf32>
    %c0_43 = arith.constant 0 : index
    %c7_44 = arith.constant 7 : index
    %218 = vector.load %arg4[%c0_43, %c7_44] : memref<48x8xf32, #tpu.memory_space<vmem>>, vector<48x1xf32>
    %219 = vector.broadcast %218 : vector<48x1xf32> to vector<48x128xf32>
    %220 = arith.addf %217, %219 : vector<48x128xf32>
    %cst_45 = arith.constant 0.000000e+00 : f32
    %221 = vector.broadcast %cst_45 : f32 to vector<48x128xf32>
    %222 = arith.cmpf oge, %220, %221 : vector<48x128xf32>
    %223 = vector.broadcast %5 : f32 to vector<48x128xf32>
    %224 = arith.mulf %223, %220 : vector<48x128xf32>
    %225 = arith.select %222, %220, %224 : vector<48x128xi1>, vector<48x128xf32>
    %c7_46 = arith.constant 7 : index
    %226 = memref.load %arg5[%c7_46] : memref<16xf32, #tpu.memory_space<smem>>
    %c15 = arith.constant 15 : index
    %227 = memref.load %arg5[%c15] : memref<16xf32, #tpu.memory_space<smem>>
    %228 = vector.broadcast %226 : f32 to vector<16x128xf32>
    %229 = arith.mulf %228, %213 : vector<16x128xf32>
    %230 = arith.addf %200, %229 : vector<16x128xf32>
    %231 = vector.extract_strided_slice %225 {offsets = [0, 0], sizes = [16, 128], strides = [1, 1]} : vector<48x128xf32> to vector<16x128xf32>
    %232 = vector.broadcast %227 : f32 to vector<16x128xf32>
    %233 = arith.mulf %232, %231 : vector<16x128xf32>
    %234 = arith.addf %204, %233 : vector<16x128xf32>
    %235 = vector.extract_strided_slice %225 {offsets = [16, 0], sizes = [16, 128], strides = [1, 1]} : vector<48x128xf32> to vector<16x128xf32>
    %236 = vector.broadcast %227 : f32 to vector<16x128xf32>
    %237 = arith.mulf %236, %235 : vector<16x128xf32>
    %238 = arith.addf %208, %237 : vector<16x128xf32>
    %239 = vector.extract_strided_slice %225 {offsets = [32, 0], sizes = [16, 128], strides = [1, 1]} : vector<48x128xf32> to vector<16x128xf32>
    %240 = vector.broadcast %227 : f32 to vector<16x128xf32>
    %241 = arith.mulf %240, %239 : vector<16x128xf32>
    %242 = arith.addf %212, %241 : vector<16x128xf32>
    %243 = arith.addf %234, %230 : vector<16x128xf32>
    %cst_47 = arith.constant 0.000000e+00 : f32
    %244 = vector.broadcast %cst_47 : f32 to vector<16x128xf32>
    %245 = arith.cmpf oge, %243, %244 : vector<16x128xf32>
    %246 = vector.broadcast %6 : f32 to vector<16x128xf32>
    %247 = arith.mulf %246, %243 : vector<16x128xf32>
    %248 = arith.select %245, %243, %247 : vector<16x128xi1>, vector<16x128xf32>
    %249 = arith.addf %238, %230 : vector<16x128xf32>
    %cst_48 = arith.constant 0.000000e+00 : f32
    %250 = vector.broadcast %cst_48 : f32 to vector<16x128xf32>
    %251 = arith.cmpf oge, %249, %250 : vector<16x128xf32>
    %252 = vector.broadcast %6 : f32 to vector<16x128xf32>
    %253 = arith.mulf %252, %249 : vector<16x128xf32>
    %254 = arith.select %251, %249, %253 : vector<16x128xi1>, vector<16x128xf32>
    %255 = arith.addf %242, %230 : vector<16x128xf32>
    %cst_49 = arith.constant 0.000000e+00 : f32
    %256 = vector.broadcast %cst_49 : f32 to vector<16x128xf32>
    %257 = arith.cmpf oge, %255, %256 : vector<16x128xf32>
    %258 = vector.broadcast %6 : f32 to vector<16x128xf32>
    %259 = arith.mulf %258, %255 : vector<16x128xf32>
    %260 = arith.select %257, %255, %259 : vector<16x128xi1>, vector<16x128xf32>
    %261 = arith.maximumf %248, %254 : vector<16x128xf32>
    %262 = arith.maximumf %261, %260 : vector<16x128xf32>
    %263 = arith.subf %248, %262 : vector<16x128xf32>
    %264 = math.exp %263 : vector<16x128xf32>
    %265 = arith.subf %254, %262 : vector<16x128xf32>
    %266 = math.exp %265 : vector<16x128xf32>
    %267 = arith.subf %260, %262 : vector<16x128xf32>
    %268 = math.exp %267 : vector<16x128xf32>
    %269 = arith.addf %264, %266 : vector<16x128xf32>
    %270 = arith.addf %269, %268 : vector<16x128xf32>
    %271 = tpu.reciprocal %270 {approx = true} : vector<16x128xf32> -> vector<16x128xf32>
    %cst_50 = arith.constant 0.333333343 : f32
    %272 = vector.broadcast %cst_50 : f32 to vector<16x128xf32>
    %273 = arith.mulf %271, %272 : vector<16x128xf32>
    %274 = arith.mulf %264, %273 : vector<16x128xf32>
    %275 = arith.mulf %266, %273 : vector<16x128xf32>
    %276 = arith.mulf %268, %273 : vector<16x128xf32>
    %277 = vector.extract_strided_slice %19 {offsets = [0, 0], sizes = [16, 128], strides = [1, 1]} : vector<48x128xf32> to vector<16x128xf32>
    %278 = arith.mulf %274, %277 : vector<16x128xf32>
    %279 = vector.extract_strided_slice %19 {offsets = [16, 0], sizes = [16, 128], strides = [1, 1]} : vector<48x128xf32> to vector<16x128xf32>
    %280 = arith.mulf %275, %279 : vector<16x128xf32>
    %281 = arith.addf %278, %280 : vector<16x128xf32>
    %282 = vector.extract_strided_slice %19 {offsets = [32, 0], sizes = [16, 128], strides = [1, 1]} : vector<48x128xf32> to vector<16x128xf32>
    %283 = arith.mulf %276, %282 : vector<16x128xf32>
    %284 = arith.addf %281, %283 : vector<16x128xf32>
    %285 = arith.addf %284, %7 : vector<16x128xf32>
    %c0_51 = arith.constant 0 : index
    %c0_52 = arith.constant 0 : index
    %c0_53 = arith.constant 0 : index
    %286 = vector.load %arg7[%c0_51, %c0_52, %c0_53] : memref<1x16x1024xf32, #tpu.memory_space<vmem>>, vector<1x16x128xf32>
    %287 = vector.shape_cast %286 : vector<1x16x128xf32> to vector<16x128xf32>
    %288 = vector.shape_cast %285 : vector<16x128xf32> to vector<1x16x128xf32>
    tpu.vector_store %arg7[%c0_51, %c0_52, %c0_53], %288 {strides = array<i32>} : memref<1x16x1024xf32, #tpu.memory_space<vmem>>, vector<1x16x128xf32>,
    %289 = vector.extract_strided_slice %45 {offsets = [0, 0], sizes = [16, 128], strides = [1, 1]} : vector<48x128xf32> to vector<16x128xf32>
    %290 = arith.mulf %274, %289 : vector<16x128xf32>
    %291 = vector.extract_strided_slice %45 {offsets = [16, 0], sizes = [16, 128], strides = [1, 1]} : vector<48x128xf32> to vector<16x128xf32>
    %292 = arith.mulf %275, %291 : vector<16x128xf32>
    %293 = arith.addf %290, %292 : vector<16x128xf32>
    %294 = vector.extract_strided_slice %45 {offsets = [32, 0], sizes = [16, 128], strides = [1, 1]} : vector<48x128xf32> to vector<16x128xf32>
    %295 = arith.mulf %276, %294 : vector<16x128xf32>
    %296 = arith.addf %293, %295 : vector<16x128xf32>
    %297 = arith.addf %296, %33 : vector<16x128xf32>
    %c0_54 = arith.constant 0 : index
    %c0_55 = arith.constant 0 : index
    %c128 = arith.constant 128 : index
    %298 = vector.load %arg7[%c0_54, %c0_55, %c128] : memref<1x16x1024xf32, #tpu.memory_space<vmem>>, vector<1x16x128xf32>
    %299 = vector.shape_cast %298 : vector<1x16x128xf32> to vector<16x128xf32>
    %300 = vector.shape_cast %297 : vector<16x128xf32> to vector<1x16x128xf32>
    tpu.vector_store %arg7[%c0_54, %c0_55, %c128], %300 {strides = array<i32>} : memref<1x16x1024xf32, #tpu.memory_space<vmem>>, vector<1x16x128xf32>,
    %301 = vector.extract_strided_slice %75 {offsets = [0, 0], sizes = [16, 128], strides = [1, 1]} : vector<48x128xf32> to vector<16x128xf32>
    %302 = arith.mulf %274, %301 : vector<16x128xf32>
    %303 = vector.extract_strided_slice %75 {offsets = [16, 0], sizes = [16, 128], strides = [1, 1]} : vector<48x128xf32> to vector<16x128xf32>
    %304 = arith.mulf %275, %303 : vector<16x128xf32>
    %305 = arith.addf %302, %304 : vector<16x128xf32>
    %306 = vector.extract_strided_slice %75 {offsets = [32, 0], sizes = [16, 128], strides = [1, 1]} : vector<48x128xf32> to vector<16x128xf32>
    %307 = arith.mulf %276, %306 : vector<16x128xf32>
    %308 = arith.addf %305, %307 : vector<16x128xf32>
    %309 = arith.addf %308, %63 : vector<16x128xf32>
    %c0_56 = arith.constant 0 : index
    %c0_57 = arith.constant 0 : index
    %c256 = arith.constant 256 : index
    %310 = vector.load %arg7[%c0_56, %c0_57, %c256] : memref<1x16x1024xf32, #tpu.memory_space<vmem>>, vector<1x16x128xf32>
    %311 = vector.shape_cast %310 : vector<1x16x128xf32> to vector<16x128xf32>
    %312 = vector.shape_cast %309 : vector<16x128xf32> to vector<1x16x128xf32>
    tpu.vector_store %arg7[%c0_56, %c0_57, %c256], %312 {strides = array<i32>} : memref<1x16x1024xf32, #tpu.memory_space<vmem>>, vector<1x16x128xf32>,
    %313 = vector.extract_strided_slice %105 {offsets = [0, 0], sizes = [16, 128], strides = [1, 1]} : vector<48x128xf32> to vector<16x128xf32>
    %314 = arith.mulf %274, %313 : vector<16x128xf32>
    %315 = vector.extract_strided_slice %105 {offsets = [16, 0], sizes = [16, 128], strides = [1, 1]} : vector<48x128xf32> to vector<16x128xf32>
    %316 = arith.mulf %275, %315 : vector<16x128xf32>
    %317 = arith.addf %314, %316 : vector<16x128xf32>
    %318 = vector.extract_strided_slice %105 {offsets = [32, 0], sizes = [16, 128], strides = [1, 1]} : vector<48x128xf32> to vector<16x128xf32>
    %319 = arith.mulf %276, %318 : vector<16x128xf32>
    %320 = arith.addf %317, %319 : vector<16x128xf32>
    %321 = arith.addf %320, %93 : vector<16x128xf32>
    %c0_58 = arith.constant 0 : index
    %c0_59 = arith.constant 0 : index
    %c384 = arith.constant 384 : index
    %322 = vector.load %arg7[%c0_58, %c0_59, %c384] : memref<1x16x1024xf32, #tpu.memory_space<vmem>>, vector<1x16x128xf32>
    %323 = vector.shape_cast %322 : vector<1x16x128xf32> to vector<16x128xf32>
    %324 = vector.shape_cast %321 : vector<16x128xf32> to vector<1x16x128xf32>
    tpu.vector_store %arg7[%c0_58, %c0_59, %c384], %324 {strides = array<i32>} : memref<1x16x1024xf32, #tpu.memory_space<vmem>>, vector<1x16x128xf32>,
    %325 = vector.extract_strided_slice %135 {offsets = [0, 0], sizes = [16, 128], strides = [1, 1]} : vector<48x128xf32> to vector<16x128xf32>
    %326 = arith.mulf %274, %325 : vector<16x128xf32>
    %327 = vector.extract_strided_slice %135 {offsets = [16, 0], sizes = [16, 128], strides = [1, 1]} : vector<48x128xf32> to vector<16x128xf32>
    %328 = arith.mulf %275, %327 : vector<16x128xf32>
    %329 = arith.addf %326, %328 : vector<16x128xf32>
    %330 = vector.extract_strided_slice %135 {offsets = [32, 0], sizes = [16, 128], strides = [1, 1]} : vector<48x128xf32> to vector<16x128xf32>
    %331 = arith.mulf %276, %330 : vector<16x128xf32>
    %332 = arith.addf %329, %331 : vector<16x128xf32>
    %333 = arith.addf %332, %123 : vector<16x128xf32>
    %c0_60 = arith.constant 0 : index
    %c0_61 = arith.constant 0 : index
    %c512 = arith.constant 512 : index
    %334 = vector.load %arg7[%c0_60, %c0_61, %c512] : memref<1x16x1024xf32, #tpu.memory_space<vmem>>, vector<1x16x128xf32>
    %335 = vector.shape_cast %334 : vector<1x16x128xf32> to vector<16x128xf32>
    %336 = vector.shape_cast %333 : vector<16x128xf32> to vector<1x16x128xf32>
    tpu.vector_store %arg7[%c0_60, %c0_61, %c512], %336 {strides = array<i32>} : memref<1x16x1024xf32, #tpu.memory_space<vmem>>, vector<1x16x128xf32>,
    %337 = vector.extract_strided_slice %165 {offsets = [0, 0], sizes = [16, 128], strides = [1, 1]} : vector<48x128xf32> to vector<16x128xf32>
    %338 = arith.mulf %274, %337 : vector<16x128xf32>
    %339 = vector.extract_strided_slice %165 {offsets = [16, 0], sizes = [16, 128], strides = [1, 1]} : vector<48x128xf32> to vector<16x128xf32>
    %340 = arith.mulf %275, %339 : vector<16x128xf32>
    %341 = arith.addf %338, %340 : vector<16x128xf32>
    %342 = vector.extract_strided_slice %165 {offsets = [32, 0], sizes = [16, 128], strides = [1, 1]} : vector<48x128xf32> to vector<16x128xf32>
    %343 = arith.mulf %276, %342 : vector<16x128xf32>
    %344 = arith.addf %341, %343 : vector<16x128xf32>
    %345 = arith.addf %344, %153 : vector<16x128xf32>
    %c0_62 = arith.constant 0 : index
    %c0_63 = arith.constant 0 : index
    %c640 = arith.constant 640 : index
    %346 = vector.load %arg7[%c0_62, %c0_63, %c640] : memref<1x16x1024xf32, #tpu.memory_space<vmem>>, vector<1x16x128xf32>
    %347 = vector.shape_cast %346 : vector<1x16x128xf32> to vector<16x128xf32>
    %348 = vector.shape_cast %345 : vector<16x128xf32> to vector<1x16x128xf32>
    tpu.vector_store %arg7[%c0_62, %c0_63, %c640], %348 {strides = array<i32>} : memref<1x16x1024xf32, #tpu.memory_space<vmem>>, vector<1x16x128xf32>,
    %349 = vector.extract_strided_slice %195 {offsets = [0, 0], sizes = [16, 128], strides = [1, 1]} : vector<48x128xf32> to vector<16x128xf32>
    %350 = arith.mulf %274, %349 : vector<16x128xf32>
    %351 = vector.extract_strided_slice %195 {offsets = [16, 0], sizes = [16, 128], strides = [1, 1]} : vector<48x128xf32> to vector<16x128xf32>
    %352 = arith.mulf %275, %351 : vector<16x128xf32>
    %353 = arith.addf %350, %352 : vector<16x128xf32>
    %354 = vector.extract_strided_slice %195 {offsets = [32, 0], sizes = [16, 128], strides = [1, 1]} : vector<48x128xf32> to vector<16x128xf32>
    %355 = arith.mulf %276, %354 : vector<16x128xf32>
    %356 = arith.addf %353, %355 : vector<16x128xf32>
    %357 = arith.addf %356, %183 : vector<16x128xf32>
    %c0_64 = arith.constant 0 : index
    %c0_65 = arith.constant 0 : index
    %c768 = arith.constant 768 : index
    %358 = vector.load %arg7[%c0_64, %c0_65, %c768] : memref<1x16x1024xf32, #tpu.memory_space<vmem>>, vector<1x16x128xf32>
    %359 = vector.shape_cast %358 : vector<1x16x128xf32> to vector<16x128xf32>
    %360 = vector.shape_cast %357 : vector<16x128xf32> to vector<1x16x128xf32>
    tpu.vector_store %arg7[%c0_64, %c0_65, %c768], %360 {strides = array<i32>} : memref<1x16x1024xf32, #tpu.memory_space<vmem>>, vector<1x16x128xf32>,
    %361 = vector.extract_strided_slice %225 {offsets = [0, 0], sizes = [16, 128], strides = [1, 1]} : vector<48x128xf32> to vector<16x128xf32>
    %362 = arith.mulf %274, %361 : vector<16x128xf32>
    %363 = vector.extract_strided_slice %225 {offsets = [16, 0], sizes = [16, 128], strides = [1, 1]} : vector<48x128xf32> to vector<16x128xf32>
    %364 = arith.mulf %275, %363 : vector<16x128xf32>
    %365 = arith.addf %362, %364 : vector<16x128xf32>
    %366 = vector.extract_strided_slice %225 {offsets = [32, 0], sizes = [16, 128], strides = [1, 1]} : vector<48x128xf32> to vector<16x128xf32>
    %367 = arith.mulf %276, %366 : vector<16x128xf32>
    %368 = arith.addf %365, %367 : vector<16x128xf32>
    %369 = arith.addf %368, %213 : vector<16x128xf32>
    %c0_66 = arith.constant 0 : index
    %c0_67 = arith.constant 0 : index
    %c896 = arith.constant 896 : index
    %370 = vector.load %arg7[%c0_66, %c0_67, %c896] : memref<1x16x1024xf32, #tpu.memory_space<vmem>>, vector<1x16x128xf32>
    %371 = vector.shape_cast %370 : vector<1x16x128xf32> to vector<16x128xf32>
    %372 = vector.shape_cast %369 : vector<16x128xf32> to vector<1x16x128xf32>
    tpu.vector_store %arg7[%c0_66, %c0_67, %c896], %372 {strides = array<i32>} : memref<1x16x1024xf32, #tpu.memory_space<vmem>>, vector<1x16x128xf32>,
    return
  }
  func.func @transform_0(%arg0: i32) -> (i32, i32) {
    %c0_i32 = arith.constant 0 : i32
    %c0_i32_0 = arith.constant 0 : i32
    %c0_i32_1 = arith.constant 0 : i32
    return %c0_i32, %c0_i32_0 : i32, i32
  }
  func.func @transform_1(%arg0: i32) -> (i32, i32, i32) {
    %c0_i32 = arith.constant 0 : i32
    %c0_i32_0 = arith.constant 0 : i32
    %c0_i32_1 = arith.constant 0 : i32
    return %arg0, %c0_i32, %c0_i32_0 : i32, i32, i32
  }
  func.func @transform_2(%arg0: i32) -> (i32, i32) {
    %c0_i32 = arith.constant 0 : i32
    %c0_i32_0 = arith.constant 0 : i32
    %c0_i32_1 = arith.constant 0 : i32
    return %c0_i32, %c0_i32_0 : i32, i32
  }
  func.func @transform_3(%arg0: i32) -> (i32, i32) {
    %c0_i32 = arith.constant 0 : i32
    %c0_i32_0 = arith.constant 0 : i32
    %c0_i32_1 = arith.constant 0 : i32
    return %c0_i32, %c0_i32_0 : i32, i32
  }
  func.func @transform_4(%arg0: i32) -> i32 {
    %c0_i32 = arith.constant 0 : i32
    %c0_i32_0 = arith.constant 0 : i32
    return %c0_i32 : i32
  }
  func.func @transform_5(%arg0: i32) -> i32 {
    %c0_i32 = arith.constant 0 : i32
    %c0_i32_0 = arith.constant 0 : i32
    return %c0_i32 : i32
  }
  func.func @transform_6(%arg0: i32) -> (i32, i32, i32) {
    %c0_i32 = arith.constant 0 : i32
    %c0_i32_0 = arith.constant 0 : i32
    %c0_i32_1 = arith.constant 0 : i32
    return %arg0, %c0_i32, %c0_i32_0 : i32, i32, i32
  }
}

</mosaic_0001>

<llo_original>
// kernel: _gnn_block_impl.1
$region0: #{_gnn_block_impl.1}
  #allocation0 [shape = 'u32[]', space=smem, size = 0x4, offset = 0x4, fixed_abs, tag = 'smem constant byte address 0x4 - core index']
  #allocation1 [shape = 'u32[144,128]{1,0:T(1,128)}', space=vmem, size = 0x12000, scoped, tag = 'internal scratch']
  %s0 = inlined_call_operand.vmem [shape: bf16[48,16], index: 0, kind: input, shape index: {}]
  %s1 = inlined_call_operand.vmem [shape: f32[2,16,1024], index: 1, kind: input, shape index: {}]
  %s2 = inlined_call_operand.vmem [shape: f32[48,8], index: 2, kind: input, shape index: {}]
  %s3 = inlined_call_operand.vmem [shape: f32[48,8], index: 3, kind: input, shape index: {}]
  %s4 = inlined_call_operand.vmem [shape: f32[16], index: 4, kind: input, shape index: {}]
  %s5 = inlined_call_operand.vmem [shape: f32[2], index: 5, kind: input, shape index: {}]
  %s6 = inlined_call_operand.vmem [shape: f32[2,16,1024], index: 6, kind: output, shape index: {}]
  %s7 = sld [smem:[#allocation0]]
  $region65: #{_gnn_block_impl.1} parent=0
    _
  %s9 = ssub.s32 1, %s7
  %s10 = scalar_select 0, %s9, %s7
  $region1: #{_gnn_block_impl.1} parent=0
    #allocation2 [shape = 'u8[512]{0}', space=smem, size = 0x200, scoped, tag = 'input window, operand 4, single buffered']
    #allocation3 [shape = 's32[2]{0}', space=sflag, size = 0x8, scoped, tag = 'scoped memory for _gnn_block_impl.1']
    #allocation4 [shape = 'u8[512]{0}', space=smem, size = 0x200, scoped, tag = 'input window, operand 5, single buffered']
    #allocation5 [shape = 's32[1]{0}', space=sflag, size = 0x4, scoped, tag = 'scoped memory for _gnn_block_impl.1']
    %11 = vsyncpa [#allocation3], 0
    %12 = vsyncpa [#allocation5], 0
    loop: start=0, step=1, limit=4
    $region2: #{_gnn_block_impl.1} parent=1 // loop_pre_header
      _
    $region3: #{_gnn_block_impl.1} parent=1 // loop_header
      %s14 = sphi 0, %s18
      %p15 = scmp.ge.s32.totalorder %s14, 4
      %s22 = sphi 0, %s22
      %s24 = sphi 0, %s22
      %s25 = sphi 0, %s24
      %s39 = sphi 0, %s25
      %s45 = sphi 0, %s47
      %s48 = sphi 0, %s45
      %s49 = sphi 0, %s48
      %s65 = sphi 0, %s49
      %s69 = sphi 0, %s69
      %s71 = sphi 0, %s69
      %s72 = sphi 0, %s71
      %s86 = sphi 0, %s72
      %s90 = sphi 0, %s90
      %s92 = sphi 0, %s90
      %s93 = sphi 0, %s92
      %s107 = sphi 0, %s93
      %s111 = sphi 0, %s111
      %s113 = sphi 0, %s111
      %s114 = sphi 0, %s113
      %s128 = sphi 0, %s114
      %s132 = sphi 0, %s132
      %s134 = sphi 0, %s132
      %s135 = sphi 0, %s134
      %s149 = sphi 0, %s135
      %s155 = sphi 0, %s157
      %s158 = sphi 0, %s155
      %s159 = sphi 0, %s158
      %s175 = sphi 0, %s159
    $region4: #{_gnn_block_impl.1} parent=1 // loop_header_branch
      %17 = sbr.rel (%p15) target = $region8
    $region5: #{_gnn_block_impl.1} parent=1 // loop_body
      %s19 = ssub.s32 %s14, 1
      %s20 = ssub.s32 %s14, 2
      %s21 = sadd.s32 %s14, 1
      %s23 = sadd.s32 %s22, 1
      %p26 = scmp.eq.s32.totalorder %s14, 1
      %p27 = scmp.ne.s32.totalorder %s22, %s24
      %p28 = scmp.eq.s32.totalorder %s14, 0
      %p29 = por %p27, %p28
      %p30 = scmp.ne.s32.totalorder %s22, %s24
      %p31 = scmp.eq.s32.totalorder %s19, 1
      %p32 = por %p30, %p31
      %p33 = scmp.ne.s32.totalorder %s24, %s25
      %p34 = scmp.eq.s32.totalorder %s19, 0
      %p35 = por %p33, %p34
      %p36 = scmp.ne.s32.totalorder %s24, %s25
      %p37 = scmp.eq.s32.totalorder %s20, 1
      %p38 = por %p36, %p37
      %p40 = scmp.ne.s32.totalorder %s25, %s39
      %p41 = scmp.eq.s32.totalorder %s20, 0
      %p42 = por %p40, %p41
      %s43 = ssub.s32 %s14, %s21
      %p44 = scmp.eq.s32.totalorder %s43, 0
      %s46 = sadd.s32 %s45, 1
      %s47 = scalar_select %p44, %s45, %s46
      %p50 = pneg %p44
      %p51 = scmp.eq.s32.totalorder %s14, 1
      %p52 = por %p50, %p51
      %p53 = scmp.ne.s32.totalorder %s45, %s48
      %p54 = scmp.eq.s32.totalorder %s14, 0
      %p55 = por %p53, %p54
      %p56 = scmp.ne.s32.totalorder %s45, %s48
      %p57 = scmp.eq.s32.totalorder %s19, 1
      %p58 = por %p56, %p57
      %p59 = scmp.ne.s32.totalorder %s48, %s49
      %p60 = scmp.eq.s32.totalorder %s19, 0
      %p61 = por %p59, %p60
      %p62 = scmp.ne.s32.totalorder %s48, %s49
      %p63 = scmp.eq.s32.totalorder %s20, 1
      %p64 = por %p62, %p63
      %p66 = scmp.ne.s32.totalorder %s49, %s65
      %p67 = scmp.eq.s32.totalorder %s20, 0
      %p68 = por %p66, %p67
      %s70 = sadd.s32 %s69, 1
      %p73 = scmp.eq.s32.totalorder %s14, 1
      %p74 = scmp.ne.s32.totalorder %s69, %s71
      %p75 = scmp.eq.s32.totalorder %s14, 0
      %p76 = por %p74, %p75
      %p77 = scmp.ne.s32.totalorder %s69, %s71
      %p78 = scmp.eq.s32.totalorder %s19, 1
      %p79 = por %p77, %p78
      %p80 = scmp.ne.s32.totalorder %s71, %s72
      %p81 = scmp.eq.s32.totalorder %s19, 0
      %p82 = por %p80, %p81
      %p83 = scmp.ne.s32.totalorder %s71, %s72
      %p84 = scmp.eq.s32.totalorder %s20, 1
      %p85 = por %p83, %p84
      %p87 = scmp.ne.s32.totalorder %s72, %s86
      %p88 = scmp.eq.s32.totalorder %s20, 0
      %p89 = por %p87, %p88
      %s91 = sadd.s32 %s90, 1
      %p94 = scmp.eq.s32.totalorder %s14, 1
      %p95 = scmp.ne.s32.totalorder %s90, %s92
      %p96 = scmp.eq.s32.totalorder %s14, 0
      %p97 = por %p95, %p96
      %p98 = scmp.ne.s32.totalorder %s90, %s92
      %p99 = scmp.eq.s32.totalorder %s19, 1
      %p100 = por %p98, %p99
      %p101 = scmp.ne.s32.totalorder %s92, %s93
      %p102 = scmp.eq.s32.totalorder %s19, 0
      %p103 = por %p101, %p102
      %p104 = scmp.ne.s32.totalorder %s92, %s93
      %p105 = scmp.eq.s32.totalorder %s20, 1
      %p106 = por %p104, %p105
      %p108 = scmp.ne.s32.totalorder %s93, %s107
      %p109 = scmp.eq.s32.totalorder %s20, 0
      %p110 = por %p108, %p109
      %s112 = sadd.s32 %s111, 1
      %p115 = scmp.eq.s32.totalorder %s14, 1
      %p116 = scmp.ne.s32.totalorder %s111, %s113
      %p117 = scmp.eq.s32.totalorder %s14, 0
      %p118 = por %p116, %p117
      %p119 = scmp.ne.s32.totalorder %s111, %s113
      %p120 = scmp.eq.s32.totalorder %s19, 1
      %p121 = por %p119, %p120
      %p122 = scmp.ne.s32.totalorder %s113, %s114
      %p123 = scmp.eq.s32.totalorder %s19, 0
      %p124 = por %p122, %p123
      %p125 = scmp.ne.s32.totalorder %s113, %s114
      %p126 = scmp.eq.s32.totalorder %s20, 1
      %p127 = por %p125, %p126
      %p129 = scmp.ne.s32.totalorder %s114, %s128
      %p130 = scmp.eq.s32.totalorder %s20, 0
      %p131 = por %p129, %p130
      %s133 = sadd.s32 %s132, 1
      %p136 = scmp.eq.s32.totalorder %s14, 1
      %p137 = scmp.ne.s32.totalorder %s132, %s134
      %p138 = scmp.eq.s32.totalorder %s14, 0
      %p139 = por %p137, %p138
      %p140 = scmp.ne.s32.totalorder %s132, %s134
      %p141 = scmp.eq.s32.totalorder %s19, 1
      %p142 = por %p140, %p141
      %p143 = scmp.ne.s32.totalorder %s134, %s135
      %p144 = scmp.eq.s32.totalorder %s19, 0
      %p145 = por %p143, %p144
      %p146 = scmp.ne.s32.totalorder %s134, %s135
      %p147 = scmp.eq.s32.totalorder %s20, 1
      %p148 = por %p146, %p147
      %p150 = scmp.ne.s32.totalorder %s135, %s149
      %p151 = scmp.eq.s32.totalorder %s20, 0
      %p152 = por %p150, %p151
      %s153 = ssub.s32 %s14, %s21
      %p154 = scmp.eq.s32.totalorder %s153, 0
      %s156 = sadd.s32 %s155, 1
      %s157 = scalar_select %p154, %s155, %s156
      %p160 = pneg %p154
      %p161 = scmp.eq.s32.totalorder %s14, 1
      %p162 = por %p160, %p161
      %p163 = scmp.ne.s32.totalorder %s155, %s158
      %p164 = scmp.eq.s32.totalorder %s14, 0
      %p165 = por %p163, %p164
      %p166 = scmp.ne.s32.totalorder %s155, %s158
      %p167 = scmp.eq.s32.totalorder %s19, 1
      %p168 = por %p166, %p167
      %p169 = scmp.ne.s32.totalorder %s158, %s159
      %p170 = scmp.eq.s32.totalorder %s19, 0
      %p171 = por %p169, %p170
      %p172 = scmp.ne.s32.totalorder %s158, %s159
      %p173 = scmp.eq.s32.totalorder %s20, 1
      %p174 = por %p172, %p173
      %p176 = scmp.ne.s32.totalorder %s159, %s175
      %p177 = scmp.eq.s32.totalorder %s20, 0
      %p178 = por %p176, %p177
      %p179 = scmp.le.s32.totalorder 1, %s14
      %p180 = scmp.lt.s32.totalorder %s14, 3
      %p181 = pnand %p179, %p180
      %p182 = pneg %p181
      // Predicated region
      $region9: #{_gnn_block_impl.1} parent=5 // pred_check
        _
      $region10: #{_gnn_block_impl.1} parent=5 // pred_check_branch
        %184 = sbr.rel (%p181) target = $region12
      $region11: #{_gnn_block_impl.1} parent=5 // pred_region
        %s185 = ssub.s32 %s14, 1
        // Predicated region
        $region13: #{_gnn_block_impl.1} parent=11 // pred_check
          %p186 = pneg %p35
        $region14: #{_gnn_block_impl.1} parent=11 // pred_check_branch
          %188 = sbr.rel (%p186) target = $region16
        $region15: #{_gnn_block_impl.1} parent=11 // pred_region
          _
        $region16: #{_gnn_block_impl.1} parent=11 // pred_fallthru
          _
        // Predicated region
        $region17: #{_gnn_block_impl.1} parent=11 // pred_check
          %p189 = pneg %p82
        $region18: #{_gnn_block_impl.1} parent=11 // pred_check_branch
          %191 = sbr.rel (%p189) target = $region20
        $region19: #{_gnn_block_impl.1} parent=11 // pred_region
          _
        $region20: #{_gnn_block_impl.1} parent=11 // pred_fallthru
          _
        // Predicated region
        $region21: #{_gnn_block_impl.1} parent=11 // pred_check
          %p192 = pneg %p103
        $region22: #{_gnn_block_impl.1} parent=11 // pred_check_branch
          %194 = sbr.rel (%p192) target = $region24
        $region23: #{_gnn_block_impl.1} parent=11 // pred_region
          _
        $region24: #{_gnn_block_impl.1} parent=11 // pred_fallthru
          _
        // Predicated region
        $region25: #{_gnn_block_impl.1} parent=11 // pred_check
          %p195 = pneg %p124
        $region26: #{_gnn_block_impl.1} parent=11 // pred_check_branch
          %197 = sbr.rel (%p195) target = $region28
        $region27: #{_gnn_block_impl.1} parent=11 // pred_region
          %s199 = ssub.s32 16, 16
          %200 = vsyncadd [#allocation3], %s199
          %s202 = sshll.u32 %s4, 4
          %s203 = int_to_ptr.vmem [resolvable:$true] %s202
          %205 = dma.vmem_to_smem %s203, 16, [#allocation2], [#allocation3]
        $region28: #{_gnn_block_impl.1} parent=11 // pred_fallthru
          _
        // Predicated region
        $region29: #{_gnn_block_impl.1} parent=11 // pred_check
          %p206 = pneg %p145
        $region30: #{_gnn_block_impl.1} parent=11 // pred_check_branch
          %208 = sbr.rel (%p206) target = $region32
        $region31: #{_gnn_block_impl.1} parent=11 // pred_region
          %s210 = ssub.s32 16, 16
          %211 = vsyncadd [#allocation5], %s210
          %s213 = sshll.u32 %s5, 4
          %s214 = int_to_ptr.vmem [resolvable:$true] %s213
          %216 = dma.vmem_to_smem %s214, 16, [#allocation4], [#allocation5]
        $region32: #{_gnn_block_impl.1} parent=11 // pred_fallthru
          _
      $region12: #{_gnn_block_impl.1} parent=5 // pred_fallthru
        _
      %p217 = scmp.lt.s32.totalorder %s14, 2
      // Predicated region
      $region33: #{_gnn_block_impl.1} parent=5 // pred_check
        %p218 = pneg %p217
      $region34: #{_gnn_block_impl.1} parent=5 // pred_check_branch
        %220 = sbr.rel (%p218) target = $region36
      $region35: #{_gnn_block_impl.1} parent=5 // pred_region
        // Predicated region
        $region37: #{_gnn_block_impl.1} parent=35 // pred_check
          %p221 = pneg %p55
        $region38: #{_gnn_block_impl.1} parent=35 // pred_check_branch
          %223 = sbr.rel (%p221) target = $region40
        $region39: #{_gnn_block_impl.1} parent=35 // pred_region
          %p224 = scmp.lt.s32.totalorder %s14, 1
          %s225 = scalar_select %p224, %s14, 1
          %s226 = smul.addr %s225, 16
          %s227 = smul.addr %s226, 8
          %s228 = scalar_lea.vmem %s1, %s227
        $region40: #{_gnn_block_impl.1} parent=35 // pred_fallthru
          _
      $region36: #{_gnn_block_impl.1} parent=5 // pred_fallthru
        _
      %p229 = scmp.le.s32.totalorder 1, %s14
      %p230 = scmp.lt.s32.totalorder %s14, 3
      %p231 = pnand %p229, %p230
      %p232 = pneg %p231
      // Predicated region
      $region41: #{_gnn_block_impl.1} parent=5 // pred_check
        _
      $region42: #{_gnn_block_impl.1} parent=5 // pred_check_branch
        %234 = sbr.rel (%p231) target = $region44
      $region43: #{_gnn_block_impl.1} parent=5 // pred_region
        %s235 = ssub.s32 %s14, 1
        // Predicated region
        $region45: #{_gnn_block_impl.1} parent=43 // pred_check
          %p236 = pneg %p124
        $region46: #{_gnn_block_impl.1} parent=43 // pred_check_branch
          %238 = sbr.rel (%p236) target = $region48
        $region47: #{_gnn_block_impl.1} parent=43 // pred_region
          %239 = dma.done [#allocation3], 16
        $region48: #{_gnn_block_impl.1} parent=43 // pred_fallthru
          _
        // Predicated region
        $region49: #{_gnn_block_impl.1} parent=43 // pred_check
          %p240 = pneg %p145
        $region50: #{_gnn_block_impl.1} parent=43 // pred_check_branch
          %242 = sbr.rel (%p240) target = $region52
        $region51: #{_gnn_block_impl.1} parent=43 // pred_region
          %243 = dma.done [#allocation5], 16
        $region52: #{_gnn_block_impl.1} parent=43 // pred_fallthru
          _
        %244 = sfence
        %p245 = pneg %p35
        %p246 = pneg %p32
        %p247 = scmp.lt.s32.totalorder %s19, 1
        %s248 = scalar_select %p247, %s19, 1
        %s249 = smul.addr %s248, 16
        %s250 = smul.addr %s249, 8
        %s251 = scalar_lea.vmem %s1, %s250
        %p252 = pneg %p61
        %p253 = pneg %p58
        %p254 = pneg %p82
        %p255 = pneg %p79
        %p256 = pneg %p103
        %p257 = pneg %p100
        %p258 = pneg %p124
        %p259 = pneg %p121
        %p260 = pneg %p145
        %p261 = pneg %p142
        %p262 = pneg %p171
        %p263 = pneg %p168
        %p264 = scmp.lt.s32.totalorder %s19, 1
        %s265 = scalar_select %p264, %s19, 1
        %s266 = smul.addr %s265, 16
        %s267 = smul.addr %s266, 8
        %s268 = scalar_lea.vmem %s6, %s267
        %p269 = scmp.lt.s32.totalorder %s19, 1
        %s270 = scalar_select %p269, %s19, 1
        %s271 = smul.addr %s270, 16
        %s272 = smul.addr %s271, 8
        %s273 = scalar_lea.vmem %s1, %s272
        %p274 = scmp.lt.s32.totalorder %s19, 1
        %s275 = scalar_select %p274, %s19, 1
        %s276 = smul.addr %s275, 16
        %s277 = smul.addr %s276, 8
        %s278 = scalar_lea.vmem %s6, %s277
        %v280 = vld [vmem:[%s273] sm:$0xff]
        %v281 = vld [vmem:[%s273 + $0x8] sm:$0xff]
        %v282 = vld [vmem:[%s273 + $0x10] sm:$0xff]
        %v283 = vld [vmem:[%s273 + $0x18] sm:$0xff]
        %v284 = vld [vmem:[%s273 + $0x20] sm:$0xff]
        %v285 = vld [vmem:[%s273 + $0x28] sm:$0xff]
        %v286 = vld [vmem:[%s273 + $0x30] sm:$0xff]
        %v287 = vld [vmem:[%s273 + $0x38] sm:$0xff]
        %v288 = vld [vmem:[%s273 + $0x40] sm:$0xff]
        %v289 = vld [vmem:[%s273 + $0x48] sm:$0xff]
        %v290 = vld [vmem:[%s273 + $0x50] sm:$0xff]
        %v291 = vld [vmem:[%s273 + $0x58] sm:$0xff]
        %v292 = vld [vmem:[%s273 + $0x60] sm:$0xff]
        %v293 = vld [vmem:[%s273 + $0x68] sm:$0xff]
        %v294 = vld [vmem:[%s273 + $0x70] sm:$0xff]
        %v295 = vld [vmem:[%s273 + $0x78] sm:$0xff]
        %v296 = vld [vmem:[%s0] sm:$0xf]
        %v297 = vld [vmem:[%s0 + $0x4] sm:$0xf]
        %v298 = vld [vmem:[%s0 + $0x8] sm:$0xf]
        %v299 = vld [vmem:[%s0 + $0xc] sm:$0xf]
        %v300 = vld [vmem:[%s0 + $0x10] sm:$0xf]
        %v301 = vld [vmem:[%s0 + $0x14] sm:$0xf]
        %v302 = vpack.c.bf16 %v288, %v280
        %v303 = vpack.c.bf16 %v289, %v281
        %v304 = vpack.c.bf16 %v290, %v282
        %v305 = vpack.c.bf16 %v291, %v283
        %v306 = vpack.c.bf16 %v292, %v284
        %v307 = vpack.c.bf16 %v293, %v285
        %v308 = vpack.c.bf16 %v294, %v286
        %v309 = vpack.c.bf16 %v295, %v287
        %v316 = vunpack.c.l.b16 %v296
        %v317 = vunpack.c.l.b16 %v297
        %v318 = vunpack.c.l.b16 %v298
        %v319 = vunpack.c.l.b16 %v299
        %v320 = vunpack.c.l.b16 %v300
        %v321 = vunpack.c.l.b16 %v301
        %v322 = vpack.c.b16 %v317, %v316
        %v323 = vpack.c.b16 %v319, %v318
        %v324 = vpack.c.b16 %v321, %v320
        %vm325 = vcmask 130048
        %v327 = vsel %vm325, %v322, 0
        %v330 = vsel %vm325, %v323, 0
        %v333 = vsel %vm325, %v324, 0
        %335 = vmatprep.subr.bf16.mxu0 0
        %336 = vmatpush1.bf16.msra.mxu0 0
        %337 = vmatprep.subr.bf16.mxu0 0
        %338 = vmatpush1.bf16.msra.mxu0 0
        %339 = vmatprep.subr.bf16.mxu0 0
        %340 = vmatpush1.bf16.msra.mxu0 0
        %341 = vmatprep.subr.bf16.mxu0 0
        %342 = vmatpush1.bf16.msra.mxu0 0
        %343 = vmatprep.subr.bf16.mxu0 0
        %344 = vmatpush1.bf16.msra.mxu0 0
        %345 = vmatprep.subr.bf16.mxu0 0
        %346 = vmatpush1.bf16.msra.mxu0 0
        %347 = vmatprep.subr.bf16.mxu0 0
        %348 = vmatpush1.bf16.msra.mxu0 0
        %349 = vmatprep.subr.bf16.mxu0 %v303
        %350 = vmatpush1.bf16.msra.mxu0 %v302
        %351 = vmatprep.subr.bf16.mxu0 0
        %352 = vmatpush2.bf16.msra.mxu0 0
        %353 = vmatprep.subr.bf16.mxu0 0
        %354 = vmatpush2.bf16.msra.mxu0 0
        %355 = vmatprep.subr.bf16.mxu0 0
        %356 = vmatpush2.bf16.msra.mxu0 0
        %357 = vmatprep.subr.bf16.mxu0 0
        %358 = vmatpush2.bf16.msra.mxu0 0
        %359 = vmatprep.subr.bf16.mxu0 0
        %360 = vmatpush2.bf16.msra.mxu0 0
        %361 = vmatprep.subr.bf16.mxu0 0
        %362 = vmatpush2.bf16.msra.mxu0 0
        %363 = vmatprep.subr.bf16.mxu0 0
        %364 = vmatpush2.bf16.msra.mxu0 0
        %365 = vmatprep.subr.bf16.mxu0 0
        %366 = vmatpush2.bf16.msra.mxu0 0
        %367 = vmatprep.mubr.bf16.mxu0 0
        %368 = vmatmul.mubr.bf16.gmra.mxu0 %v327
        %v369 = vpop.f32.mrf.mxu0
        %v370 = vadd.f32 0.0, %v369
        %v371 = vpop.f32.mrf.mxu0
        %v372 = vadd.f32 0.0, %v371
        %v373 = vpop.f32.mrf.mxu0
        %v374 = vadd.f32 0.0, %v373
        %v375 = vpop.f32.mrf.mxu0
        %v376 = vadd.f32 0.0, %v375
        %377 = vmatprep.mubr.bf16.mxu0 0
        %378 = vmatmul.mubr.bf16.gmra.mxu0 %v330
        %v379 = vpop.f32.mrf.mxu0
        %v380 = vadd.f32 0.0, %v379
        %v381 = vpop.f32.mrf.mxu0
        %v382 = vadd.f32 0.0, %v381
        %v383 = vpop.f32.mrf.mxu0
        %v384 = vadd.f32 0.0, %v383
        %v385 = vpop.f32.mrf.mxu0
        %v386 = vadd.f32 0.0, %v385
        %387 = vmatprep.mubr.bf16.mxu0 0
        %388 = vmatmul.mubr.bf16.gmra.mxu0 %v333
        %v389 = vpop.f32.mrf.mxu0
        %v390 = vadd.f32 0.0, %v389
        %v391 = vpop.f32.mrf.mxu0
        %v392 = vadd.f32 0.0, %v391
        %v393 = vpop.f32.mrf.mxu0
        %v394 = vadd.f32 0.0, %v393
        %v395 = vpop.f32.mrf.mxu0
        %v396 = vadd.f32 0.0, %v395
        %397 = vdwg.mxu0
        %398 = vmatprep.subr.bf16.mxu0 0
        %399 = vmatpush1.bf16.msra.mxu0 0
        %400 = vmatprep.subr.bf16.mxu0 0
        %401 = vmatpush1.bf16.msra.mxu0 0
        %402 = vmatprep.subr.bf16.mxu0 0
        %403 = vmatpush1.bf16.msra.mxu0 0
        %404 = vmatprep.subr.bf16.mxu0 0
        %405 = vmatpush1.bf16.msra.mxu0 0
        %406 = vmatprep.subr.bf16.mxu0 0
        %407 = vmatpush1.bf16.msra.mxu0 0
        %408 = vmatprep.subr.bf16.mxu0 0
        %409 = vmatpush1.bf16.msra.mxu0 0
        %410 = vmatprep.subr.bf16.mxu0 0
        %411 = vmatpush1.bf16.msra.mxu0 0
        %412 = vmatprep.subr.bf16.mxu0 %v305
        %413 = vmatpush1.bf16.msra.mxu0 %v304
        %414 = vmatprep.subr.bf16.mxu0 0
        %415 = vmatpush2.bf16.msra.mxu0 0
        %416 = vmatprep.subr.bf16.mxu0 0
        %417 = vmatpush2.bf16.msra.mxu0 0
        %418 = vmatprep.subr.bf16.mxu0 0
        %419 = vmatpush2.bf16.msra.mxu0 0
        %420 = vmatprep.subr.bf16.mxu0 0
        %421 = vmatpush2.bf16.msra.mxu0 0
        %422 = vmatprep.subr.bf16.mxu0 0
        %423 = vmatpush2.bf16.msra.mxu0 0
        %424 = vmatprep.subr.bf16.mxu0 0
        %425 = vmatpush2.bf16.msra.mxu0 0
        %426 = vmatprep.subr.bf16.mxu0 0
        %427 = vmatpush2.bf16.msra.mxu0 0
        %428 = vmatprep.subr.bf16.mxu0 0
        %429 = vmatpush2.bf16.msra.mxu0 0
        %430 = vmatprep.mubr.bf16.mxu0 0
        %431 = vmatmul.mubr.bf16.gmra.mxu0 %v327
        %v432 = vpop.f32.mrf.mxu0
        %v433 = vadd.f32 0.0, %v432
        %v434 = vpop.f32.mrf.mxu0
        %v435 = vadd.f32 0.0, %v434
        %v436 = vpop.f32.mrf.mxu0
        %v437 = vadd.f32 0.0, %v436
        %v438 = vpop.f32.mrf.mxu0
        %v439 = vadd.f32 0.0, %v438
        %440 = vmatprep.mubr.bf16.mxu0 0
        %441 = vmatmul.mubr.bf16.gmra.mxu0 %v330
        %v442 = vpop.f32.mrf.mxu0
        %v443 = vadd.f32 0.0, %v442
        %v444 = vpop.f32.mrf.mxu0
        %v445 = vadd.f32 0.0, %v444
        %v446 = vpop.f32.mrf.mxu0
        %v447 = vadd.f32 0.0, %v446
        %v448 = vpop.f32.mrf.mxu0
        %v449 = vadd.f32 0.0, %v448
        %450 = vmatprep.mubr.bf16.mxu0 0
        %451 = vmatmul.mubr.bf16.gmra.mxu0 %v333
        %v452 = vpop.f32.mrf.mxu0
        %v453 = vadd.f32 0.0, %v452
        %v454 = vpop.f32.mrf.mxu0
        %v455 = vadd.f32 0.0, %v454
        %v456 = vpop.f32.mrf.mxu0
        %v457 = vadd.f32 0.0, %v456
        %v458 = vpop.f32.mrf.mxu0
        %v459 = vadd.f32 0.0, %v458
        %460 = vdwg.mxu0
        %461 = vmatprep.subr.bf16.mxu0 0
        %462 = vmatpush1.bf16.msra.mxu0 0
        %463 = vmatprep.subr.bf16.mxu0 0
        %464 = vmatpush1.bf16.msra.mxu0 0
        %465 = vmatprep.subr.bf16.mxu0 0
        %466 = vmatpush1.bf16.msra.mxu0 0
        %467 = vmatprep.subr.bf16.mxu0 0
        %468 = vmatpush1.bf16.msra.mxu0 0
        %469 = vmatprep.subr.bf16.mxu0 0
        %470 = vmatpush1.bf16.msra.mxu0 0
        %471 = vmatprep.subr.bf16.mxu0 0
        %472 = vmatpush1.bf16.msra.mxu0 0
        %473 = vmatprep.subr.bf16.mxu0 0
        %474 = vmatpush1.bf16.msra.mxu0 0
        %475 = vmatprep.subr.bf16.mxu0 %v307
        %476 = vmatpush1.bf16.msra.mxu0 %v306
        %477 = vmatprep.subr.bf16.mxu0 0
        %478 = vmatpush2.bf16.msra.mxu0 0
        %479 = vmatprep.subr.bf16.mxu0 0
        %480 = vmatpush2.bf16.msra.mxu0 0
        %481 = vmatprep.subr.bf16.mxu0 0
        %482 = vmatpush2.bf16.msra.mxu0 0
        %483 = vmatprep.subr.bf16.mxu0 0
        %484 = vmatpush2.bf16.msra.mxu0 0
        %485 = vmatprep.subr.bf16.mxu0 0
        %486 = vmatpush2.bf16.msra.mxu0 0
        %487 = vmatprep.subr.bf16.mxu0 0
        %488 = vmatpush2.bf16.msra.mxu0 0
        %489 = vmatprep.subr.bf16.mxu0 0
        %490 = vmatpush2.bf16.msra.mxu0 0
        %491 = vmatprep.subr.bf16.mxu0 0
        %492 = vmatpush2.bf16.msra.mxu0 0
        %493 = vmatprep.mubr.bf16.mxu0 0
        %494 = vmatmul.mubr.bf16.gmra.mxu0 %v327
        %v495 = vpop.f32.mrf.mxu0
        %v496 = vadd.f32 0.0, %v495
        %v497 = vpop.f32.mrf.mxu0
        %v498 = vadd.f32 0.0, %v497
        %v499 = vpop.f32.mrf.mxu0
        %v500 = vadd.f32 0.0, %v499
        %v501 = vpop.f32.mrf.mxu0
        %v502 = vadd.f32 0.0, %v501
        %503 = vmatprep.mubr.bf16.mxu0 0
        %504 = vmatmul.mubr.bf16.gmra.mxu0 %v330
        %v505 = vpop.f32.mrf.mxu0
        %v506 = vadd.f32 0.0, %v505
        %v507 = vpop.f32.mrf.mxu0
        %v508 = vadd.f32 0.0, %v507
        %v509 = vpop.f32.mrf.mxu0
        %v510 = vadd.f32 0.0, %v509
        %v511 = vpop.f32.mrf.mxu0
        %v512 = vadd.f32 0.0, %v511
        %513 = vmatprep.mubr.bf16.mxu0 0
        %514 = vmatmul.mubr.bf16.gmra.mxu0 %v333
        %v515 = vpop.f32.mrf.mxu0
        %v516 = vadd.f32 0.0, %v515
        %v517 = vpop.f32.mrf.mxu0
        %v518 = vadd.f32 0.0, %v517
        %v519 = vpop.f32.mrf.mxu0
        %v520 = vadd.f32 0.0, %v519
        %v521 = vpop.f32.mrf.mxu0
        %v522 = vadd.f32 0.0, %v521
        %523 = vdwg.mxu0
        %524 = vmatprep.subr.bf16.mxu0 0
        %525 = vmatpush1.bf16.msra.mxu0 0
        %526 = vmatprep.subr.bf16.mxu0 0
        %527 = vmatpush1.bf16.msra.mxu0 0
        %528 = vmatprep.subr.bf16.mxu0 0
        %529 = vmatpush1.bf16.msra.mxu0 0
        %530 = vmatprep.subr.bf16.mxu0 0
        %531 = vmatpush1.bf16.msra.mxu0 0
        %532 = vmatprep.subr.bf16.mxu0 0
        %533 = vmatpush1.bf16.msra.mxu0 0
        %534 = vmatprep.subr.bf16.mxu0 0
        %535 = vmatpush1.bf16.msra.mxu0 0
        %536 = vmatprep.subr.bf16.mxu0 0
        %537 = vmatpush1.bf16.msra.mxu0 0
        %538 = vmatprep.subr.bf16.mxu0 %v309
        %539 = vmatpush1.bf16.msra.mxu0 %v308
        %540 = vmatprep.subr.bf16.mxu0 0
        %541 = vmatpush2.bf16.msra.mxu0 0
        %542 = vmatprep.subr.bf16.mxu0 0
        %543 = vmatpush2.bf16.msra.mxu0 0
        %544 = vmatprep.subr.bf16.mxu0 0
        %545 = vmatpush2.bf16.msra.mxu0 0
        %546 = vmatprep.subr.bf16.mxu0 0
        %547 = vmatpush2.bf16.msra.mxu0 0
        %548 = vmatprep.subr.bf16.mxu0 0
        %549 = vmatpush2.bf16.msra.mxu0 0
        %550 = vmatprep.subr.bf16.mxu0 0
        %551 = vmatpush2.bf16.msra.mxu0 0
        %552 = vmatprep.subr.bf16.mxu0 0
        %553 = vmatpush2.bf16.msra.mxu0 0
        %554 = vmatprep.subr.bf16.mxu0 0
        %555 = vmatpush2.bf16.msra.mxu0 0
        %556 = vmatprep.mubr.bf16.mxu0 0
        %557 = vmatmul.mubr.bf16.gmra.mxu0 %v327
        %v558 = vpop.f32.mrf.mxu0
        %v559 = vadd.f32 0.0, %v558
        %v560 = vpop.f32.mrf.mxu0
        %v561 = vadd.f32 0.0, %v560
        %v562 = vpop.f32.mrf.mxu0
        %v563 = vadd.f32 0.0, %v562
        %v564 = vpop.f32.mrf.mxu0
        %v565 = vadd.f32 0.0, %v564
        %566 = vmatprep.mubr.bf16.mxu0 0
        %567 = vmatmul.mubr.bf16.gmra.mxu0 %v330
        %v568 = vpop.f32.mrf.mxu0
        %v569 = vadd.f32 0.0, %v568
        %v570 = vpop.f32.mrf.mxu0
        %v571 = vadd.f32 0.0, %v570
        %v572 = vpop.f32.mrf.mxu0
        %v573 = vadd.f32 0.0, %v572
        %v574 = vpop.f32.mrf.mxu0
        %v575 = vadd.f32 0.0, %v574
        %576 = vmatprep.mubr.bf16.mxu0 0
        %577 = vmatmul.mubr.bf16.gmra.mxu0 %v333
        %v578 = vpop.f32.mrf.mxu0
        %v579 = vadd.f32 0.0, %v578
        %v580 = vpop.f32.mrf.mxu0
        %v581 = vadd.f32 0.0, %v580
        %v582 = vpop.f32.mrf.mxu0
        %v583 = vadd.f32 0.0, %v582
        %v584 = vpop.f32.mrf.mxu0
        %v585 = vadd.f32 0.0, %v584
        %586 = vdwg.mxu0
        %s587 = sld [smem:[#allocation4]]
        %s588 = sld [smem:[#allocation4 + $0x1]]
        %v589 = vld [vmem:[%s2] sm:$0xff]
        %v590 = vld [vmem:[%s2 + $0x8] sm:$0xff]
        %v591 = vld [vmem:[%s2 + $0x10] sm:$0xff]
        %v592 = vld [vmem:[%s2 + $0x18] sm:$0xff]
        %v593 = vld [vmem:[%s2 + $0x20] sm:$0xff]
        %v594 = vld [vmem:[%s2 + $0x28] sm:$0xff]
        %596 = vset.pattern.permute.xlu0 0
        %597 = vperm.xlu0 %596, %v589
        %v598 = vpop.permute.xlu0 %597
        %601 = vset.pattern.permute.xlu0 0
        %602 = vperm.xlu0 %601, %v590
        %v603 = vpop.permute.xlu0 %602
        %606 = vset.pattern.permute.xlu0 0
        %607 = vperm.xlu0 %606, %v591
        %v608 = vpop.permute.xlu0 %607
        %611 = vset.pattern.permute.xlu0 0
        %612 = vperm.xlu0 %611, %v592
        %v613 = vpop.permute.xlu0 %612
        %616 = vset.pattern.permute.xlu0 0
        %617 = vperm.xlu0 %616, %v593
        %v618 = vpop.permute.xlu0 %617
        %621 = vset.pattern.permute.xlu0 0
        %622 = vperm.xlu0 %621, %v594
        %v623 = vpop.permute.xlu0 %622
        %v625 = vmul.f32 %v370, %v598
        %v626 = vmul.f32 %v374, %v603
        %v627 = vmul.f32 %v380, %v608
        %v628 = vmul.f32 %v384, %v613
        %v629 = vmul.f32 %v390, %v618
        %v630 = vmul.f32 %v394, %v623
        %v631 = vld [vmem:[%s3] sm:$0xff]
        %v632 = vld [vmem:[%s3 + $0x8] sm:$0xff]
        %v633 = vld [vmem:[%s3 + $0x10] sm:$0xff]
        %v634 = vld [vmem:[%s3 + $0x18] sm:$0xff]
        %v635 = vld [vmem:[%s3 + $0x20] sm:$0xff]
        %v636 = vld [vmem:[%s3 + $0x28] sm:$0xff]
        %638 = vset.pattern.permute.xlu0 0
        %639 = vperm.xlu0 %638, %v631
        %v640 = vpop.permute.xlu0 %639
        %643 = vset.pattern.permute.xlu0 0
        %644 = vperm.xlu0 %643, %v632
        %v645 = vpop.permute.xlu0 %644
        %648 = vset.pattern.permute.xlu0 0
        %649 = vperm.xlu0 %648, %v633
        %v650 = vpop.permute.xlu0 %649
        %653 = vset.pattern.permute.xlu0 0
        %654 = vperm.xlu0 %653, %v634
        %v655 = vpop.permute.xlu0 %654
        %658 = vset.pattern.permute.xlu0 0
        %659 = vperm.xlu0 %658, %v635
        %v660 = vpop.permute.xlu0 %659
        %663 = vset.pattern.permute.xlu0 0
        %664 = vperm.xlu0 %663, %v636
        %v665 = vpop.permute.xlu0 %664
        %v667 = vadd.f32 %v625, %v640
        %v668 = vadd.f32 %v626, %v645
        %v669 = vadd.f32 %v627, %v650
        %v670 = vadd.f32 %v628, %v655
        %v671 = vadd.f32 %v629, %v660
        %v672 = vadd.f32 %v630, %v665
        %vm673 = vcmp.ge.f32.partialorder %v667, 0.0
        %vm674 = vcmp.ge.f32.partialorder %v668, 0.0
        %vm675 = vcmp.ge.f32.partialorder %v669, 0.0
        %vm676 = vcmp.ge.f32.partialorder %v670, 0.0
        %vm677 = vcmp.ge.f32.partialorder %v671, 0.0
        %vm678 = vcmp.ge.f32.partialorder %v672, 0.0
        %v679 = vstv %s587
        %v680 = vmul.f32 %v679, %v667
        %v681 = vmul.f32 %v679, %v668
        %v682 = vmul.f32 %v679, %v669
        %v683 = vmul.f32 %v679, %v670
        %v684 = vmul.f32 %v679, %v671
        %v685 = vmul.f32 %v679, %v672
        %v686 = vsel %vm673, %v667, %v680
        %v687 = vsel %vm674, %v668, %v681
        %v688 = vsel %vm675, %v669, %v682
        %v689 = vsel %vm676, %v670, %v683
        %v690 = vsel %vm677, %v671, %v684
        %v691 = vsel %vm678, %v672, %v685
        %s692 = sld [smem:[#allocation2]]
        %s693 = sld [smem:[#allocation2 + $0x8]]
        %v694 = vstv %s692
        %v695 = vmul.f32 %v694, %v280
        %v696 = vmul.f32 %v694, %v288
        %v697 = vstv %s693
        %v698 = vmul.f32 %v697, %v686
        %v699 = vmul.f32 %v697, %v687
        %v700 = vmul.f32 %v697, %v688
        %v701 = vmul.f32 %v697, %v689
        %v702 = vmul.f32 %v697, %v690
        %v703 = vmul.f32 %v697, %v691
        %704 = vset.pattern.permute.xlu0 1
        %705 = vperm.xlu0 %704, %v589
        %v706 = vpop.permute.xlu0 %705
        %708 = vset.pattern.permute.xlu0 1
        %709 = vperm.xlu0 %708, %v590
        %v710 = vpop.permute.xlu0 %709
        %712 = vset.pattern.permute.xlu0 1
        %713 = vperm.xlu0 %712, %v591
        %v714 = vpop.permute.xlu0 %713
        %716 = vset.pattern.permute.xlu0 1
        %717 = vperm.xlu0 %716, %v592
        %v718 = vpop.permute.xlu0 %717
        %720 = vset.pattern.permute.xlu0 1
        %721 = vperm.xlu0 %720, %v593
        %v722 = vpop.permute.xlu0 %721
        %724 = vset.pattern.permute.xlu0 1
        %725 = vperm.xlu0 %724, %v594
        %v726 = vpop.permute.xlu0 %725
        %v728 = vmul.f32 %v372, %v706
        %v729 = vmul.f32 %v376, %v710
        %v730 = vmul.f32 %v382, %v714
        %v731 = vmul.f32 %v386, %v718
        %v732 = vmul.f32 %v392, %v722
        %v733 = vmul.f32 %v396, %v726
        %734 = vset.pattern.permute.xlu0 1
        %735 = vperm.xlu0 %734, %v631
        %v736 = vpop.permute.xlu0 %735
        %738 = vset.pattern.permute.xlu0 1
        %739 = vperm.xlu0 %738, %v632
        %v740 = vpop.permute.xlu0 %739
        %742 = vset.pattern.permute.xlu0 1
        %743 = vperm.xlu0 %742, %v633
        %v744 = vpop.permute.xlu0 %743
        %746 = vset.pattern.permute.xlu0 1
        %747 = vperm.xlu0 %746, %v634
        %v748 = vpop.permute.xlu0 %747
        %750 = vset.pattern.permute.xlu0 1
        %751 = vperm.xlu0 %750, %v635
        %v752 = vpop.permute.xlu0 %751
        %754 = vset.pattern.permute.xlu0 1
        %755 = vperm.xlu0 %754, %v636
        %v756 = vpop.permute.xlu0 %755
        %v758 = vadd.f32 %v728, %v736
        %v759 = vadd.f32 %v729, %v740
        %v760 = vadd.f32 %v730, %v744
        %v761 = vadd.f32 %v731, %v748
        %v762 = vadd.f32 %v732, %v752
        %v763 = vadd.f32 %v733, %v756
        %vm764 = vcmp.ge.f32.partialorder %v758, 0.0
        %vm765 = vcmp.ge.f32.partialorder %v759, 0.0
        %vm766 = vcmp.ge.f32.partialorder %v760, 0.0
        %vm767 = vcmp.ge.f32.partialorder %v761, 0.0
        %vm768 = vcmp.ge.f32.partialorder %v762, 0.0
        %vm769 = vcmp.ge.f32.partialorder %v763, 0.0
        %v770 = vmul.f32 %v679, %v758
        %v771 = vmul.f32 %v679, %v759
        %v772 = vmul.f32 %v679, %v760
        %v773 = vmul.f32 %v679, %v761
        %v774 = vmul.f32 %v679, %v762
        %v775 = vmul.f32 %v679, %v763
        %v776 = vsel %vm764, %v758, %v770
        %v777 = vsel %vm765, %v759, %v771
        %v778 = vsel %vm766, %v760, %v772
        %v779 = vsel %vm767, %v761, %v773
        %v780 = vsel %vm768, %v762, %v774
        %v781 = vsel %vm769, %v763, %v775
        %s782 = sld [smem:[#allocation2 + $0x1]]
        %s783 = sld [smem:[#allocation2 + $0x9]]
        %v784 = vstv %s782
        %v785 = vmul.f32 %v784, %v281
        %v786 = vmul.f32 %v784, %v289
        %v787 = vadd.f32 %v695, %v785
        %v788 = vadd.f32 %v696, %v786
        %v789 = vstv %s783
        %v790 = vmul.f32 %v789, %v776
        %v791 = vmul.f32 %v789, %v777
        %v792 = vadd.f32 %v698, %v790
        %v793 = vadd.f32 %v699, %v791
        %v794 = vmul.f32 %v789, %v778
        %v795 = vmul.f32 %v789, %v779
        %v796 = vadd.f32 %v700, %v794
        %v797 = vadd.f32 %v701, %v795
        %v798 = vmul.f32 %v789, %v780
        %v799 = vmul.f32 %v789, %v781
        %v800 = vadd.f32 %v702, %v798
        %v801 = vadd.f32 %v703, %v799
        %802 = vset.pattern.permute.xlu0 2
        %803 = vperm.xlu0 %802, %v589
        %v804 = vpop.permute.xlu0 %803
        %806 = vset.pattern.permute.xlu0 2
        %807 = vperm.xlu0 %806, %v590
        %v808 = vpop.permute.xlu0 %807
        %810 = vset.pattern.permute.xlu0 2
        %811 = vperm.xlu0 %810, %v591
        %v812 = vpop.permute.xlu0 %811
        %814 = vset.pattern.permute.xlu0 2
        %815 = vperm.xlu0 %814, %v592
        %v816 = vpop.permute.xlu0 %815
        %818 = vset.pattern.permute.xlu0 2
        %819 = vperm.xlu0 %818, %v593
        %v820 = vpop.permute.xlu0 %819
        %822 = vset.pattern.permute.xlu0 2
        %823 = vperm.xlu0 %822, %v594
        %v824 = vpop.permute.xlu0 %823
        %v826 = vmul.f32 %v433, %v804
        %v827 = vmul.f32 %v437, %v808
        %v828 = vmul.f32 %v443, %v812
        %v829 = vmul.f32 %v447, %v816
        %v830 = vmul.f32 %v453, %v820
        %v831 = vmul.f32 %v457, %v824
        %832 = vset.pattern.permute.xlu0 2
        %833 = vperm.xlu0 %832, %v631
        %v834 = vpop.permute.xlu0 %833
        %836 = vset.pattern.permute.xlu0 2
        %837 = vperm.xlu0 %836, %v632
        %v838 = vpop.permute.xlu0 %837
        %840 = vset.pattern.permute.xlu0 2
        %841 = vperm.xlu0 %840, %v633
        %v842 = vpop.permute.xlu0 %841
        %844 = vset.pattern.permute.xlu0 2
        %845 = vperm.xlu0 %844, %v634
        %v846 = vpop.permute.xlu0 %845
        %848 = vset.pattern.permute.xlu0 2
        %849 = vperm.xlu0 %848, %v635
        %v850 = vpop.permute.xlu0 %849
        %852 = vset.pattern.permute.xlu0 2
        %853 = vperm.xlu0 %852, %v636
        %v854 = vpop.permute.xlu0 %853
        %v856 = vadd.f32 %v826, %v834
        %v857 = vadd.f32 %v827, %v838
        %v858 = vadd.f32 %v828, %v842
        %v859 = vadd.f32 %v829, %v846
        %v860 = vadd.f32 %v830, %v850
        %v861 = vadd.f32 %v831, %v854
        %vm862 = vcmp.ge.f32.partialorder %v856, 0.0
        %vm863 = vcmp.ge.f32.partialorder %v857, 0.0
        %vm864 = vcmp.ge.f32.partialorder %v858, 0.0
        %vm865 = vcmp.ge.f32.partialorder %v859, 0.0
        %vm866 = vcmp.ge.f32.partialorder %v860, 0.0
        %vm867 = vcmp.ge.f32.partialorder %v861, 0.0
        %v868 = vmul.f32 %v679, %v856
        %v869 = vmul.f32 %v679, %v857
        %v870 = vmul.f32 %v679, %v858
        %v871 = vmul.f32 %v679, %v859
        %v872 = vmul.f32 %v679, %v860
        %v873 = vmul.f32 %v679, %v861
        %v874 = vsel %vm862, %v856, %v868
        %v875 = vsel %vm863, %v857, %v869
        %v876 = vsel %vm864, %v858, %v870
        %v877 = vsel %vm865, %v859, %v871
        %v878 = vsel %vm866, %v860, %v872
        %v879 = vsel %vm867, %v861, %v873
        %s880 = sld [smem:[#allocation2 + $0x2]]
        %s881 = sld [smem:[#allocation2 + $0xa]]
        %v882 = vstv %s880
        %v883 = vmul.f32 %v882, %v282
        %v884 = vmul.f32 %v882, %v290
        %v885 = vadd.f32 %v787, %v883
        %v886 = vadd.f32 %v788, %v884
        %v887 = vstv %s881
        %v888 = vmul.f32 %v887, %v874
        %v889 = vmul.f32 %v887, %v875
        %v890 = vadd.f32 %v792, %v888
        %v891 = vadd.f32 %v793, %v889
        %v892 = vmul.f32 %v887, %v876
        %v893 = vmul.f32 %v887, %v877
        %v894 = vadd.f32 %v796, %v892
        %v895 = vadd.f32 %v797, %v893
        %v896 = vmul.f32 %v887, %v878
        %v897 = vmul.f32 %v887, %v879
        %v898 = vadd.f32 %v800, %v896
        %v899 = vadd.f32 %v801, %v897
        %900 = vset.pattern.permute.xlu0 3
        %901 = vperm.xlu0 %900, %v589
        %v902 = vpop.permute.xlu0 %901
        %904 = vset.pattern.permute.xlu0 3
        %905 = vperm.xlu0 %904, %v590
        %v906 = vpop.permute.xlu0 %905
        %908 = vset.pattern.permute.xlu0 3
        %909 = vperm.xlu0 %908, %v591
        %v910 = vpop.permute.xlu0 %909
        %912 = vset.pattern.permute.xlu0 3
        %913 = vperm.xlu0 %912, %v592
        %v914 = vpop.permute.xlu0 %913
        %916 = vset.pattern.permute.xlu0 3
        %917 = vperm.xlu0 %916, %v593
        %v918 = vpop.permute.xlu0 %917
        %920 = vset.pattern.permute.xlu0 3
        %921 = vperm.xlu0 %920, %v594
        %v922 = vpop.permute.xlu0 %921
        %v924 = vmul.f32 %v435, %v902
        %v925 = vmul.f32 %v439, %v906
        %v926 = vmul.f32 %v445, %v910
        %v927 = vmul.f32 %v449, %v914
        %v928 = vmul.f32 %v455, %v918
        %v929 = vmul.f32 %v459, %v922
        %930 = vset.pattern.permute.xlu0 3
        %931 = vperm.xlu0 %930, %v631
        %v932 = vpop.permute.xlu0 %931
        %934 = vset.pattern.permute.xlu0 3
        %935 = vperm.xlu0 %934, %v632
        %v936 = vpop.permute.xlu0 %935
        %938 = vset.pattern.permute.xlu0 3
        %939 = vperm.xlu0 %938, %v633
        %v940 = vpop.permute.xlu0 %939
        %942 = vset.pattern.permute.xlu0 3
        %943 = vperm.xlu0 %942, %v634
        %v944 = vpop.permute.xlu0 %943
        %946 = vset.pattern.permute.xlu0 3
        %947 = vperm.xlu0 %946, %v635
        %v948 = vpop.permute.xlu0 %947
        %950 = vset.pattern.permute.xlu0 3
        %951 = vperm.xlu0 %950, %v636
        %v952 = vpop.permute.xlu0 %951
        %v954 = vadd.f32 %v924, %v932
        %v955 = vadd.f32 %v925, %v936
        %v956 = vadd.f32 %v926, %v940
        %v957 = vadd.f32 %v927, %v944
        %v958 = vadd.f32 %v928, %v948
        %v959 = vadd.f32 %v929, %v952
        %vm960 = vcmp.ge.f32.partialorder %v954, 0.0
        %vm961 = vcmp.ge.f32.partialorder %v955, 0.0
        %vm962 = vcmp.ge.f32.partialorder %v956, 0.0
        %vm963 = vcmp.ge.f32.partialorder %v957, 0.0
        %vm964 = vcmp.ge.f32.partialorder %v958, 0.0
        %vm965 = vcmp.ge.f32.partialorder %v959, 0.0
        %v966 = vmul.f32 %v679, %v954
        %v967 = vmul.f32 %v679, %v955
        %v968 = vmul.f32 %v679, %v956
        %v969 = vmul.f32 %v679, %v957
        %v970 = vmul.f32 %v679, %v958
        %v971 = vmul.f32 %v679, %v959
        %v972 = vsel %vm960, %v954, %v966
        %v973 = vsel %vm961, %v955, %v967
        %v974 = vsel %vm962, %v956, %v968
        %v975 = vsel %vm963, %v957, %v969
        %v976 = vsel %vm964, %v958, %v970
        %v977 = vsel %vm965, %v959, %v971
        %s978 = sld [smem:[#allocation2 + $0x3]]
        %s979 = sld [smem:[#allocation2 + $0xb]]
        %v980 = vstv %s978
        %v981 = vmul.f32 %v980, %v283
        %v982 = vmul.f32 %v980, %v291
        %v983 = vadd.f32 %v885, %v981
        %v984 = vadd.f32 %v886, %v982
        %v985 = vstv %s979
        %v986 = vmul.f32 %v985, %v972
        %v987 = vmul.f32 %v985, %v973
        %v988 = vadd.f32 %v890, %v986
        %v989 = vadd.f32 %v891, %v987
        %v990 = vmul.f32 %v985, %v974
        %v991 = vmul.f32 %v985, %v975
        %v992 = vadd.f32 %v894, %v990
        %v993 = vadd.f32 %v895, %v991
        %v994 = vmul.f32 %v985, %v976
        %v995 = vmul.f32 %v985, %v977
        %v996 = vadd.f32 %v898, %v994
        %v997 = vadd.f32 %v899, %v995
        %998 = vset.pattern.permute.xlu0 4
        %999 = vperm.xlu0 %998, %v589
        %v1000 = vpop.permute.xlu0 %999
        %1002 = vset.pattern.permute.xlu0 4
        %1003 = vperm.xlu0 %1002, %v590
        %v1004 = vpop.permute.xlu0 %1003
        %1006 = vset.pattern.permute.xlu0 4
        %1007 = vperm.xlu0 %1006, %v591
        %v1008 = vpop.permute.xlu0 %1007
        %1010 = vset.pattern.permute.xlu0 4
        %1011 = vperm.xlu0 %1010, %v592
        %v1012 = vpop.permute.xlu0 %1011
        %1014 = vset.pattern.permute.xlu0 4
        %1015 = vperm.xlu0 %1014, %v593
        %v1016 = vpop.permute.xlu0 %1015
        %1018 = vset.pattern.permute.xlu0 4
        %1019 = vperm.xlu0 %1018, %v594
        %v1020 = vpop.permute.xlu0 %1019
        %v1022 = vmul.f32 %v496, %v1000
        %v1023 = vmul.f32 %v500, %v1004
        %v1024 = vmul.f32 %v506, %v1008
        %v1025 = vmul.f32 %v510, %v1012
        %v1026 = vmul.f32 %v516, %v1016
        %v1027 = vmul.f32 %v520, %v1020
        %1028 = vset.pattern.permute.xlu0 4
        %1029 = vperm.xlu0 %1028, %v631
        %v1030 = vpop.permute.xlu0 %1029
        %1032 = vset.pattern.permute.xlu0 4
        %1033 = vperm.xlu0 %1032, %v632
        %v1034 = vpop.permute.xlu0 %1033
        %1036 = vset.pattern.permute.xlu0 4
        %1037 = vperm.xlu0 %1036, %v633
        %v1038 = vpop.permute.xlu0 %1037
        %1040 = vset.pattern.permute.xlu0 4
        %1041 = vperm.xlu0 %1040, %v634
        %v1042 = vpop.permute.xlu0 %1041
        %1044 = vset.pattern.permute.xlu0 4
        %1045 = vperm.xlu0 %1044, %v635
        %v1046 = vpop.permute.xlu0 %1045
        %1048 = vset.pattern.permute.xlu0 4
        %1049 = vperm.xlu0 %1048, %v636
        %v1050 = vpop.permute.xlu0 %1049
        %v1052 = vadd.f32 %v1022, %v1030
        %v1053 = vadd.f32 %v1023, %v1034
        %v1054 = vadd.f32 %v1024, %v1038
        %v1055 = vadd.f32 %v1025, %v1042
        %v1056 = vadd.f32 %v1026, %v1046
        %v1057 = vadd.f32 %v1027, %v1050
        %vm1058 = vcmp.ge.f32.partialorder %v1052, 0.0
        %vm1059 = vcmp.ge.f32.partialorder %v1053, 0.0
        %vm1060 = vcmp.ge.f32.partialorder %v1054, 0.0
        %vm1061 = vcmp.ge.f32.partialorder %v1055, 0.0
        %vm1062 = vcmp.ge.f32.partialorder %v1056, 0.0
        %vm1063 = vcmp.ge.f32.partialorder %v1057, 0.0
        %v1064 = vmul.f32 %v679, %v1052
        %v1065 = vmul.f32 %v679, %v1053
        %v1066 = vmul.f32 %v679, %v1054
        %v1067 = vmul.f32 %v679, %v1055
        %v1068 = vmul.f32 %v679, %v1056
        %v1069 = vmul.f32 %v679, %v1057
        %v1070 = vsel %vm1058, %v1052, %v1064
        %v1071 = vsel %vm1059, %v1053, %v1065
        %v1072 = vsel %vm1060, %v1054, %v1066
        %v1073 = vsel %vm1061, %v1055, %v1067
        %v1074 = vsel %vm1062, %v1056, %v1068
        %v1075 = vsel %vm1063, %v1057, %v1069
        %s1076 = sld [smem:[#allocation2 + $0x4]]
        %s1077 = sld [smem:[#allocation2 + $0xc]]
        %v1078 = vstv %s1076
        %v1079 = vmul.f32 %v1078, %v284
        %v1080 = vmul.f32 %v1078, %v292
        %v1081 = vadd.f32 %v983, %v1079
        %v1082 = vadd.f32 %v984, %v1080
        %v1083 = vstv %s1077
        %v1084 = vmul.f32 %v1083, %v1070
        %v1085 = vmul.f32 %v1083, %v1071
        %v1086 = vadd.f32 %v988, %v1084
        %v1087 = vadd.f32 %v989, %v1085
        %v1088 = vmul.f32 %v1083, %v1072
        %v1089 = vmul.f32 %v1083, %v1073
        %v1090 = vadd.f32 %v992, %v1088
        %v1091 = vadd.f32 %v993, %v1089
        %v1092 = vmul.f32 %v1083, %v1074
        %v1093 = vmul.f32 %v1083, %v1075
        %v1094 = vadd.f32 %v996, %v1092
        %v1095 = vadd.f32 %v997, %v1093
        %1096 = vset.pattern.permute.xlu0 5
        %1097 = vperm.xlu0 %1096, %v589
        %v1098 = vpop.permute.xlu0 %1097
        %1100 = vset.pattern.permute.xlu0 5
        %1101 = vperm.xlu0 %1100, %v590
        %v1102 = vpop.permute.xlu0 %1101
        %1104 = vset.pattern.permute.xlu0 5
        %1105 = vperm.xlu0 %1104, %v591
        %v1106 = vpop.permute.xlu0 %1105
        %1108 = vset.pattern.permute.xlu0 5
        %1109 = vperm.xlu0 %1108, %v592
        %v1110 = vpop.permute.xlu0 %1109
        %1112 = vset.pattern.permute.xlu0 5
        %1113 = vperm.xlu0 %1112, %v593
        %v1114 = vpop.permute.xlu0 %1113
        %1116 = vset.pattern.permute.xlu0 5
        %1117 = vperm.xlu0 %1116, %v594
        %v1118 = vpop.permute.xlu0 %1117
        %v1120 = vmul.f32 %v498, %v1098
        %v1121 = vmul.f32 %v502, %v1102
        %v1122 = vmul.f32 %v508, %v1106
        %v1123 = vmul.f32 %v512, %v1110
        %v1124 = vmul.f32 %v518, %v1114
        %v1125 = vmul.f32 %v522, %v1118
        %1126 = vset.pattern.permute.xlu0 5
        %1127 = vperm.xlu0 %1126, %v631
        %v1128 = vpop.permute.xlu0 %1127
        %1130 = vset.pattern.permute.xlu0 5
        %1131 = vperm.xlu0 %1130, %v632
        %v1132 = vpop.permute.xlu0 %1131
        %1134 = vset.pattern.permute.xlu0 5
        %1135 = vperm.xlu0 %1134, %v633
        %v1136 = vpop.permute.xlu0 %1135
        %1138 = vset.pattern.permute.xlu0 5
        %1139 = vperm.xlu0 %1138, %v634
        %v1140 = vpop.permute.xlu0 %1139
        %1142 = vset.pattern.permute.xlu0 5
        %1143 = vperm.xlu0 %1142, %v635
        %v1144 = vpop.permute.xlu0 %1143
        %1146 = vset.pattern.permute.xlu0 5
        %1147 = vperm.xlu0 %1146, %v636
        %v1148 = vpop.permute.xlu0 %1147
        %v1150 = vadd.f32 %v1120, %v1128
        %v1151 = vadd.f32 %v1121, %v1132
        %v1152 = vadd.f32 %v1122, %v1136
        %v1153 = vadd.f32 %v1123, %v1140
        %v1154 = vadd.f32 %v1124, %v1144
        %v1155 = vadd.f32 %v1125, %v1148
        %vm1156 = vcmp.ge.f32.partialorder %v1150, 0.0
        %vm1157 = vcmp.ge.f32.partialorder %v1151, 0.0
        %vm1158 = vcmp.ge.f32.partialorder %v1152, 0.0
        %vm1159 = vcmp.ge.f32.partialorder %v1153, 0.0
        %vm1160 = vcmp.ge.f32.partialorder %v1154, 0.0
        %vm1161 = vcmp.ge.f32.partialorder %v1155, 0.0
        %v1162 = vmul.f32 %v679, %v1150
        %v1163 = vmul.f32 %v679, %v1151
        %v1164 = vmul.f32 %v679, %v1152
        %v1165 = vmul.f32 %v679, %v1153
        %v1166 = vmul.f32 %v679, %v1154
        %v1167 = vmul.f32 %v679, %v1155
        %v1168 = vsel %vm1156, %v1150, %v1162
        %v1169 = vsel %vm1157, %v1151, %v1163
        %v1170 = vsel %vm1158, %v1152, %v1164
        %v1171 = vsel %vm1159, %v1153, %v1165
        %v1172 = vsel %vm1160, %v1154, %v1166
        %v1173 = vsel %vm1161, %v1155, %v1167
        %s1174 = sld [smem:[#allocation2 + $0x5]]
        %s1175 = sld [smem:[#allocation2 + $0xd]]
        %v1176 = vstv %s1174
        %v1177 = vmul.f32 %v1176, %v285
        %v1178 = vmul.f32 %v1176, %v293
        %v1179 = vadd.f32 %v1081, %v1177
        %v1180 = vadd.f32 %v1082, %v1178
        %v1181 = vstv %s1175
        %v1182 = vmul.f32 %v1181, %v1168
        %v1183 = vmul.f32 %v1181, %v1169
        %v1184 = vadd.f32 %v1086, %v1182
        %v1185 = vadd.f32 %v1087, %v1183
        %v1186 = vmul.f32 %v1181, %v1170
        %v1187 = vmul.f32 %v1181, %v1171
        %v1188 = vadd.f32 %v1090, %v1186
        %v1189 = vadd.f32 %v1091, %v1187
        %v1190 = vmul.f32 %v1181, %v1172
        %v1191 = vmul.f32 %v1181, %v1173
        %v1192 = vadd.f32 %v1094, %v1190
        %v1193 = vadd.f32 %v1095, %v1191
        %1194 = vset.pattern.permute.xlu0 6
        %1195 = vperm.xlu0 %1194, %v589
        %v1196 = vpop.permute.xlu0 %1195
        %1198 = vset.pattern.permute.xlu0 6
        %1199 = vperm.xlu0 %1198, %v590
        %v1200 = vpop.permute.xlu0 %1199
        %1202 = vset.pattern.permute.xlu0 6
        %1203 = vperm.xlu0 %1202, %v591
        %v1204 = vpop.permute.xlu0 %1203
        %1206 = vset.pattern.permute.xlu0 6
        %1207 = vperm.xlu0 %1206, %v592
        %v1208 = vpop.permute.xlu0 %1207
        %1210 = vset.pattern.permute.xlu0 6
        %1211 = vperm.xlu0 %1210, %v593
        %v1212 = vpop.permute.xlu0 %1211
        %1214 = vset.pattern.permute.xlu0 6
        %1215 = vperm.xlu0 %1214, %v594
        %v1216 = vpop.permute.xlu0 %1215
        %v1218 = vmul.f32 %v559, %v1196
        %v1219 = vmul.f32 %v563, %v1200
        %v1220 = vmul.f32 %v569, %v1204
        %v1221 = vmul.f32 %v573, %v1208
        %v1222 = vmul.f32 %v579, %v1212
        %v1223 = vmul.f32 %v583, %v1216
        %1224 = vset.pattern.permute.xlu0 6
        %1225 = vperm.xlu0 %1224, %v631
        %v1226 = vpop.permute.xlu0 %1225
        %1228 = vset.pattern.permute.xlu0 6
        %1229 = vperm.xlu0 %1228, %v632
        %v1230 = vpop.permute.xlu0 %1229
        %1232 = vset.pattern.permute.xlu0 6
        %1233 = vperm.xlu0 %1232, %v633
        %v1234 = vpop.permute.xlu0 %1233
        %1236 = vset.pattern.permute.xlu0 6
        %1237 = vperm.xlu0 %1236, %v634
        %v1238 = vpop.permute.xlu0 %1237
        %1240 = vset.pattern.permute.xlu0 6
        %1241 = vperm.xlu0 %1240, %v635
        %v1242 = vpop.permute.xlu0 %1241
        %1244 = vset.pattern.permute.xlu0 6
        %1245 = vperm.xlu0 %1244, %v636
        %v1246 = vpop.permute.xlu0 %1245
        %v1248 = vadd.f32 %v1218, %v1226
        %v1249 = vadd.f32 %v1219, %v1230
        %v1250 = vadd.f32 %v1220, %v1234
        %v1251 = vadd.f32 %v1221, %v1238
        %v1252 = vadd.f32 %v1222, %v1242
        %v1253 = vadd.f32 %v1223, %v1246
        %vm1254 = vcmp.ge.f32.partialorder %v1248, 0.0
        %vm1255 = vcmp.ge.f32.partialorder %v1249, 0.0
        %vm1256 = vcmp.ge.f32.partialorder %v1250, 0.0
        %vm1257 = vcmp.ge.f32.partialorder %v1251, 0.0
        %vm1258 = vcmp.ge.f32.partialorder %v1252, 0.0
        %vm1259 = vcmp.ge.f32.partialorder %v1253, 0.0
        %v1260 = vmul.f32 %v679, %v1248
        %v1261 = vmul.f32 %v679, %v1249
        %v1262 = vmul.f32 %v679, %v1250
        %v1263 = vmul.f32 %v679, %v1251
        %v1264 = vmul.f32 %v679, %v1252
        %v1265 = vmul.f32 %v679, %v1253
        %v1266 = vsel %vm1254, %v1248, %v1260
        %v1267 = vsel %vm1255, %v1249, %v1261
        %v1268 = vsel %vm1256, %v1250, %v1262
        %v1269 = vsel %vm1257, %v1251, %v1263
        %v1270 = vsel %vm1258, %v1252, %v1264
        %v1271 = vsel %vm1259, %v1253, %v1265
        %s1272 = sld [smem:[#allocation2 + $0x6]]
        %s1273 = sld [smem:[#allocation2 + $0xe]]
        %v1274 = vstv %s1272
        %v1275 = vmul.f32 %v1274, %v286
        %v1276 = vmul.f32 %v1274, %v294
        %v1277 = vadd.f32 %v1179, %v1275
        %v1278 = vadd.f32 %v1180, %v1276
        %v1279 = vstv %s1273
        %v1280 = vmul.f32 %v1279, %v1266
        %v1281 = vmul.f32 %v1279, %v1267
        %v1282 = vadd.f32 %v1184, %v1280
        %v1283 = vadd.f32 %v1185, %v1281
        %v1284 = vmul.f32 %v1279, %v1268
        %v1285 = vmul.f32 %v1279, %v1269
        %v1286 = vadd.f32 %v1188, %v1284
        %v1287 = vadd.f32 %v1189, %v1285
        %v1288 = vmul.f32 %v1279, %v1270
        %v1289 = vmul.f32 %v1279, %v1271
        %v1290 = vadd.f32 %v1192, %v1288
        %v1291 = vadd.f32 %v1193, %v1289
        %1292 = vset.pattern.permute.xlu0 7
        %1293 = vperm.xlu0 %1292, %v589
        %v1294 = vpop.permute.xlu0 %1293
        %1296 = vset.pattern.permute.xlu0 7
        %1297 = vperm.xlu0 %1296, %v590
        %v1298 = vpop.permute.xlu0 %1297
        %1300 = vset.pattern.permute.xlu0 7
        %1301 = vperm.xlu0 %1300, %v591
        %v1302 = vpop.permute.xlu0 %1301
        %1304 = vset.pattern.permute.xlu0 7
        %1305 = vperm.xlu0 %1304, %v592
        %v1306 = vpop.permute.xlu0 %1305
        %1308 = vset.pattern.permute.xlu0 7
        %1309 = vperm.xlu0 %1308, %v593
        %v1310 = vpop.permute.xlu0 %1309
        %1312 = vset.pattern.permute.xlu0 7
        %1313 = vperm.xlu0 %1312, %v594
        %v1314 = vpop.permute.xlu0 %1313
        %v1316 = vmul.f32 %v561, %v1294
        %v1317 = vmul.f32 %v565, %v1298
        %v1318 = vmul.f32 %v571, %v1302
        %v1319 = vmul.f32 %v575, %v1306
        %v1320 = vmul.f32 %v581, %v1310
        %v1321 = vmul.f32 %v585, %v1314
        %1322 = vset.pattern.permute.xlu0 7
        %1323 = vperm.xlu0 %1322, %v631
        %v1324 = vpop.permute.xlu0 %1323
        %1326 = vset.pattern.permute.xlu0 7
        %1327 = vperm.xlu0 %1326, %v632
        %v1328 = vpop.permute.xlu0 %1327
        %1330 = vset.pattern.permute.xlu0 7
        %1331 = vperm.xlu0 %1330, %v633
        %v1332 = vpop.permute.xlu0 %1331
        %1334 = vset.pattern.permute.xlu0 7
        %1335 = vperm.xlu0 %1334, %v634
        %v1336 = vpop.permute.xlu0 %1335
        %1338 = vset.pattern.permute.xlu0 7
        %1339 = vperm.xlu0 %1338, %v635
        %v1340 = vpop.permute.xlu0 %1339
        %1342 = vset.pattern.permute.xlu0 7
        %1343 = vperm.xlu0 %1342, %v636
        %v1344 = vpop.permute.xlu0 %1343
        %v1346 = vadd.f32 %v1316, %v1324
        %v1347 = vadd.f32 %v1317, %v1328
        %v1348 = vadd.f32 %v1318, %v1332
        %v1349 = vadd.f32 %v1319, %v1336
        %v1350 = vadd.f32 %v1320, %v1340
        %v1351 = vadd.f32 %v1321, %v1344
        %vm1352 = vcmp.ge.f32.partialorder %v1346, 0.0
        %vm1353 = vcmp.ge.f32.partialorder %v1347, 0.0
        %vm1354 = vcmp.ge.f32.partialorder %v1348, 0.0
        %vm1355 = vcmp.ge.f32.partialorder %v1349, 0.0
        %vm1356 = vcmp.ge.f32.partialorder %v1350, 0.0
        %vm1357 = vcmp.ge.f32.partialorder %v1351, 0.0
        %v1358 = vmul.f32 %v679, %v1346
        %v1359 = vmul.f32 %v679, %v1347
        %v1360 = vmul.f32 %v679, %v1348
        %v1361 = vmul.f32 %v679, %v1349
        %v1362 = vmul.f32 %v679, %v1350
        %v1363 = vmul.f32 %v679, %v1351
        %v1364 = vsel %vm1352, %v1346, %v1358
        %v1365 = vsel %vm1353, %v1347, %v1359
        %v1366 = vsel %vm1354, %v1348, %v1360
        %v1367 = vsel %vm1355, %v1349, %v1361
        %v1368 = vsel %vm1356, %v1350, %v1362
        %v1369 = vsel %vm1357, %v1351, %v1363
        %s1370 = sld [smem:[#allocation2 + $0x7]]
        %s1371 = sld [smem:[#allocation2 + $0xf]]
        %v1372 = vstv %s1370
        %v1373 = vmul.f32 %v1372, %v287
        %v1374 = vmul.f32 %v1372, %v295
        %v1375 = vadd.f32 %v1277, %v1373
        %v1376 = vadd.f32 %v1278, %v1374
        %v1377 = vstv %s1371
        %v1378 = vmul.f32 %v1377, %v1364
        %v1379 = vmul.f32 %v1377, %v1365
        %v1380 = vadd.f32 %v1282, %v1378
        %v1381 = vadd.f32 %v1283, %v1379
        %v1382 = vmul.f32 %v1377, %v1366
        %v1383 = vmul.f32 %v1377, %v1367
        %v1384 = vadd.f32 %v1286, %v1382
        %v1385 = vadd.f32 %v1287, %v1383
        %v1386 = vmul.f32 %v1377, %v1368
        %v1387 = vmul.f32 %v1377, %v1369
        %v1388 = vadd.f32 %v1290, %v1386
        %v1389 = vadd.f32 %v1291, %v1387
        %v1390 = vadd.f32 %v1380, %v1375
        %v1391 = vadd.f32 %v1381, %v1376
        %vm1392 = vcmp.ge.f32.partialorder %v1390, 0.0
        %vm1393 = vcmp.ge.f32.partialorder %v1391, 0.0
        %v1394 = vstv %s588
        %v1395 = vmul.f32 %v1394, %v1390
        %v1396 = vmul.f32 %v1394, %v1391
        %v1397 = vsel %vm1392, %v1390, %v1395
        %v1398 = vsel %vm1393, %v1391, %v1396
        %v1399 = vadd.f32 %v1384, %v1375
        %v1400 = vadd.f32 %v1385, %v1376
        %vm1401 = vcmp.ge.f32.partialorder %v1399, 0.0
        %vm1402 = vcmp.ge.f32.partialorder %v1400, 0.0
        %v1403 = vmul.f32 %v1394, %v1399
        %v1404 = vmul.f32 %v1394, %v1400
        %v1405 = vsel %vm1401, %v1399, %v1403
        %v1406 = vsel %vm1402, %v1400, %v1404
        %v1407 = vadd.f32 %v1388, %v1375
        %v1408 = vadd.f32 %v1389, %v1376
        %vm1409 = vcmp.ge.f32.partialorder %v1407, 0.0
        %vm1410 = vcmp.ge.f32.partialorder %v1408, 0.0
        %v1411 = vmul.f32 %v1394, %v1407
        %v1412 = vmul.f32 %v1394, %v1408
        %v1413 = vsel %vm1409, %v1407, %v1411
        %v1414 = vsel %vm1410, %v1408, %v1412
        %v1415 = vmax.f32 %v1397, %v1405
        %v1416 = vmax.f32 %v1398, %v1406
        %v1417 = vmax.f32 %v1415, %v1413
        %v1418 = vmax.f32 %v1416, %v1414
        %v1419 = vsub.f32 %v1397, %v1417
        %v1420 = vsub.f32 %v1398, %v1418
        %v1421 = vmul.f32 %v1419, 1.442695
        %v1422 = vpow.pop %v1421
        %v1423 = vmul.f32 %v1420, 1.442695
        %v1424 = vpow.pop %v1423
        %v1425 = vsub.f32 %v1405, %v1417
        %v1426 = vsub.f32 %v1406, %v1418
        %v1427 = vmul.f32 %v1425, 1.442695
        %v1428 = vpow.pop %v1427
        %v1429 = vmul.f32 %v1426, 1.442695
        %v1430 = vpow.pop %v1429
        %v1431 = vsub.f32 %v1413, %v1417
        %v1432 = vsub.f32 %v1414, %v1418
        %v1433 = vmul.f32 %v1431, 1.442695
        %v1434 = vpow.pop %v1433
        %v1435 = vmul.f32 %v1432, 1.442695
        %v1436 = vpow.pop %v1435
        %v1437 = vadd.f32 %v1422, %v1428
        %v1438 = vadd.f32 %v1424, %v1430
        %v1439 = vadd.f32 %v1437, %v1434
        %v1440 = vadd.f32 %v1438, %v1436
        %v1441 = vrcp.pop %v1439
        %v1442 = vrcp.pop %v1440
        %v1443 = vmul.f32 %v1441, 0.33333334
        %v1444 = vmul.f32 %v1442, 0.33333334
        %v1445 = vmul.f32 %v1422, %v1443
        %v1446 = vmul.f32 %v1424, %v1444
        %v1447 = vmul.f32 %v1428, %v1443
        %v1448 = vmul.f32 %v1430, %v1444
        %v1449 = vmul.f32 %v1434, %v1443
        %v1450 = vmul.f32 %v1436, %v1444
        %v1451 = vmul.f32 %v1445, %v686
        %v1452 = vmul.f32 %v1446, %v687
        %v1453 = vmul.f32 %v1447, %v688
        %v1454 = vmul.f32 %v1448, %v689
        %v1455 = vadd.f32 %v1451, %v1453
        %v1456 = vadd.f32 %v1452, %v1454
        %v1457 = vmul.f32 %v1449, %v690
        %v1458 = vmul.f32 %v1450, %v691
        %v1459 = vadd.f32 %v1455, %v1457
        %v1460 = vadd.f32 %v1456, %v1458
        %v1461 = vadd.f32 %v1459, %v280
        %v1462 = vadd.f32 %v1460, %v288
        %1463 = vst [vmem:[%s278] sm:$0xff] %v1461
        %1464 = vst [vmem:[%s278 + $0x40] sm:$0xff] %v1462
        %v1465 = vmul.f32 %v1445, %v776
        %v1466 = vmul.f32 %v1446, %v777
        %v1467 = vmul.f32 %v1447, %v778
        %v1468 = vmul.f32 %v1448, %v779
        %v1469 = vadd.f32 %v1465, %v1467
        %v1470 = vadd.f32 %v1466, %v1468
        %v1471 = vmul.f32 %v1449, %v780
        %v1472 = vmul.f32 %v1450, %v781
        %v1473 = vadd.f32 %v1469, %v1471
        %v1474 = vadd.f32 %v1470, %v1472
        %v1475 = vadd.f32 %v1473, %v281
        %v1476 = vadd.f32 %v1474, %v289
        %1477 = vst [vmem:[%s278 + $0x8] sm:$0xff] %v1475
        %1478 = vst [vmem:[%s278 + $0x48] sm:$0xff] %v1476
        %v1479 = vmul.f32 %v1445, %v874
        %v1480 = vmul.f32 %v1446, %v875
        %v1481 = vmul.f32 %v1447, %v876
        %v1482 = vmul.f32 %v1448, %v877
        %v1483 = vadd.f32 %v1479, %v1481
        %v1484 = vadd.f32 %v1480, %v1482
        %v1485 = vmul.f32 %v1449, %v878
        %v1486 = vmul.f32 %v1450, %v879
        %v1487 = vadd.f32 %v1483, %v1485
        %v1488 = vadd.f32 %v1484, %v1486
        %v1489 = vadd.f32 %v1487, %v282
        %v1490 = vadd.f32 %v1488, %v290
        %1491 = vst [vmem:[%s278 + $0x10] sm:$0xff] %v1489
        %1492 = vst [vmem:[%s278 + $0x50] sm:$0xff] %v1490
        %v1493 = vmul.f32 %v1445, %v972
        %v1494 = vmul.f32 %v1446, %v973
        %v1495 = vmul.f32 %v1447, %v974
        %v1496 = vmul.f32 %v1448, %v975
        %v1497 = vadd.f32 %v1493, %v1495
        %v1498 = vadd.f32 %v1494, %v1496
        %v1499 = vmul.f32 %v1449, %v976
        %v1500 = vmul.f32 %v1450, %v977
        %v1501 = vadd.f32 %v1497, %v1499
        %v1502 = vadd.f32 %v1498, %v1500
        %v1503 = vadd.f32 %v1501, %v283
        %v1504 = vadd.f32 %v1502, %v291
        %1505 = vst [vmem:[%s278 + $0x18] sm:$0xff] %v1503
        %1506 = vst [vmem:[%s278 + $0x58] sm:$0xff] %v1504
        %v1507 = vmul.f32 %v1445, %v1070
        %v1508 = vmul.f32 %v1446, %v1071
        %v1509 = vmul.f32 %v1447, %v1072
        %v1510 = vmul.f32 %v1448, %v1073
        %v1511 = vadd.f32 %v1507, %v1509
        %v1512 = vadd.f32 %v1508, %v1510
        %v1513 = vmul.f32 %v1449, %v1074
        %v1514 = vmul.f32 %v1450, %v1075
        %v1515 = vadd.f32 %v1511, %v1513
        %v1516 = vadd.f32 %v1512, %v1514
        %v1517 = vadd.f32 %v1515, %v284
        %v1518 = vadd.f32 %v1516, %v292
        %1519 = vst [vmem:[%s278 + $0x20] sm:$0xff] %v1517
        %1520 = vst [vmem:[%s278 + $0x60] sm:$0xff] %v1518
        %v1521 = vmul.f32 %v1445, %v1168
        %v1522 = vmul.f32 %v1446, %v1169
        %v1523 = vmul.f32 %v1447, %v1170
        %v1524 = vmul.f32 %v1448, %v1171
        %v1525 = vadd.f32 %v1521, %v1523
        %v1526 = vadd.f32 %v1522, %v1524
        %v1527 = vmul.f32 %v1449, %v1172
        %v1528 = vmul.f32 %v1450, %v1173
        %v1529 = vadd.f32 %v1525, %v1527
        %v1530 = vadd.f32 %v1526, %v1528
        %v1531 = vadd.f32 %v1529, %v285
        %v1532 = vadd.f32 %v1530, %v293
        %1533 = vst [vmem:[%s278 + $0x28] sm:$0xff] %v1531
        %1534 = vst [vmem:[%s278 + $0x68] sm:$0xff] %v1532
        %v1535 = vmul.f32 %v1445, %v1266
        %v1536 = vmul.f32 %v1446, %v1267
        %v1537 = vmul.f32 %v1447, %v1268
        %v1538 = vmul.f32 %v1448, %v1269
        %v1539 = vadd.f32 %v1535, %v1537
        %v1540 = vadd.f32 %v1536, %v1538
        %v1541 = vmul.f32 %v1449, %v1270
        %v1542 = vmul.f32 %v1450, %v1271
        %v1543 = vadd.f32 %v1539, %v1541
        %v1544 = vadd.f32 %v1540, %v1542
        %v1545 = vadd.f32 %v1543, %v286
        %v1546 = vadd.f32 %v1544, %v294
        %1547 = vst [vmem:[%s278 + $0x30] sm:$0xff] %v1545
        %1548 = vst [vmem:[%s278 + $0x70] sm:$0xff] %v1546
        %v1549 = vmul.f32 %v1445, %v1364
        %v1550 = vmul.f32 %v1446, %v1365
        %v1551 = vmul.f32 %v1447, %v1366
        %v1552 = vmul.f32 %v1448, %v1367
        %v1553 = vadd.f32 %v1549, %v1551
        %v1554 = vadd.f32 %v1550, %v1552
        %v1555 = vmul.f32 %v1449, %v1368
        %v1556 = vmul.f32 %v1450, %v1369
        %v1557 = vadd.f32 %v1553, %v1555
        %v1558 = vadd.f32 %v1554, %v1556
        %v1559 = vadd.f32 %v1557, %v287
        %v1560 = vadd.f32 %v1558, %v295
        %1561 = vst [vmem:[%s278 + $0x38] sm:$0xff] %v1559
        %1562 = vst [vmem:[%s278 + $0x78] sm:$0xff] %v1560
        %p1563 = scmp.lt.s32.totalorder %s19, 1
        %s1564 = scalar_select %p1563, %s19, 1
        %s1565 = smul.addr %s1564, 16
        %s1566 = smul.addr %s1565, 8
        %s1567 = scalar_lea.vmem %s6, %s1566
        // Predicated region
        $region53: #{_gnn_block_impl.1} parent=43 // pred_check
          %p1568 = pneg %p168
        $region54: #{_gnn_block_impl.1} parent=43 // pred_check_branch
          %1570 = sbr.rel (%p1568) target = $region56
        $region55: #{_gnn_block_impl.1} parent=43 // pred_region
          _
        $region56: #{_gnn_block_impl.1} parent=43 // pred_fallthru
          _
      $region44: #{_gnn_block_impl.1} parent=5 // pred_fallthru
        _
      %p1571 = scmp.le.s32.totalorder 2, %s14
      // Predicated region
      $region57: #{_gnn_block_impl.1} parent=5 // pred_check
        %p1572 = pneg %p1571
      $region58: #{_gnn_block_impl.1} parent=5 // pred_check_branch
        %1574 = sbr.rel (%p1572) target = $region60
      $region59: #{_gnn_block_impl.1} parent=5 // pred_region
        %s1575 = ssub.s32 %s14, 2
        // Predicated region
        $region61: #{_gnn_block_impl.1} parent=59 // pred_check
          %p1576 = pneg %p174
        $region62: #{_gnn_block_impl.1} parent=59 // pred_check_branch
          %1578 = sbr.rel (%p1576) target = $region64
        $region63: #{_gnn_block_impl.1} parent=59 // pred_region
          %p1579 = scmp.lt.s32.totalorder %s20, 1
          %s1580 = scalar_select %p1579, %s20, 1
          %s1581 = smul.addr %s1580, 16
          %s1582 = smul.addr %s1581, 8
          %s1583 = scalar_lea.vmem %s6, %s1582
        $region64: #{_gnn_block_impl.1} parent=59 // pred_fallthru
          _
      $region60: #{_gnn_block_impl.1} parent=5 // pred_fallthru
        _
    $region6: #{_gnn_block_impl.1} parent=1 // loop_footer
      %s18 = sadd.s32 1, %s14
    $region7: #{_gnn_block_impl.1} parent=1 // loop_footer_branch
      %13 = sbr.rel target = $region3
    $region8: #{_gnn_block_impl.1} parent=1 // loop_exit
      _
    %1584 = vsyncpa [#allocation3], 1
    %s1585 = scalar_lea.sflag [#allocation3], 1
    %1586 = vsyncpa %s1585, 1
    %1587 = vsyncpa [#allocation5], 1

</llo_original>
